<compile_context>
chip_gen: v5e
topology: v5e:2x2
jax: 0.10.0
libtpu: 0.0.40
codegen_flags: <defaults>
</compile_context>

<pallas_src>
import math

import jax
import jax.numpy as jnp
from jax.experimental import pallas as pl
from jax.experimental.pallas import tpu as pltpu

_MiB = 1024 * 1024


def make_transformer_layer_kernel(bt, seq, embed_dim, num_heads, hidden_dim,
                                  compute_dtype, approx_recip):
    head_dim = embed_dim // num_heads
    rows = bt * seq

    def kernel(x_ref,
               wqkv_ref, bqkv_ref,
               wo_ref, bo_ref,
               w1_ref, b1_ref,
               w2_ref, b2_ref,
               o_ref):
        # ---- flatten the (bt, S, E) block to (bt*S, E): every dense matmul
        #      below presents an MXU-sized M (row tile), not just S rows.
        # NOTE: these reshapes are layout-free only when S is a multiple of the
        # sublane pack (8 for f32) and E a multiple of 128.
        # TODO(synk): pad S/E/H in the wrapper when they are not lane/sublane
        # aligned (small test shapes still run, just with lower lane util).
        x_f32 = x_ref[...].reshape(rows, embed_dim)            # residual path (f32)
        x_c = x_f32.astype(compute_dtype)                      # MXU operand dtype

        # ---- fused QKV projection: one (rows, E) @ (E, 3E) matmul, f32 accum.
        #      (1/sqrt(head_dim) is pre-folded into the Q columns in
        #      prepare_params, so there is no per-score scaling.)
        qkv = jnp.dot(x_c, wqkv_ref[...],
                      preferred_element_type=jnp.float32) + bqkv_ref[...]

        def split_heads(t):                                    # (rows, E) ->
            t = t.reshape(bt, seq, num_heads, head_dim)        # (bt, S, NH, hd)
            t = jnp.transpose(t, (0, 2, 1, 3))                 # (bt, NH, S, hd)
            return t.reshape(bt * num_heads, seq, head_dim)    # (bt*NH, S, hd)

        # Slice, cast to the MXU operand dtype, then split: only the (rows, E)
        # compute-dtype views stay live (no full (rows, 3E) low-precision copy).
        q = split_heads(qkv[:, :embed_dim].astype(compute_dtype))
        k = split_heads(qkv[:, embed_dim:2 * embed_dim].astype(compute_dtype))
        v = split_heads(qkv[:, 2 * embed_dim:].astype(compute_dtype))

        # ---- scaled dot-product attention, batched over (batch*heads):
        #      one MXU stream, no per-head python loop / concatenate.
        # TODO(synk): flash-style key tiling (online softmax) once the f32
        # score tensors (2 * bt*NH*S*S*4 bytes) exceed ~8 MiB (v7x) /
        # ~16 MiB (v5e/v6e).
        s = jnp.einsum("bqd,bkd->bqk", q, k,
                       preferred_element_type=jnp.float32)     # (bt*NH, S, S) f32
        s_max = jnp.max(s, axis=-1, keepdims=True)
        p = jnp.exp(s - s_max)
        denom = jnp.sum(p, axis=-1, keepdims=True)
        p = p * pl.reciprocal(denom, approx=approx_recip)      # EUP, not VALU div
        ctx = jnp.einsum("bqk,bkd->bqd", p.astype(compute_dtype), v,
                         preferred_element_type=jnp.float32)   # (bt*NH, S, hd)

        # ---- merge heads back to (rows, E); relayout runs on compute_dtype
        #      (half the bytes in bf16 mode).
        # TODO(synk): fold the merge into the output projection
        # (einsum('bhqd,hde->bqe') with wo reshaped to (NH, hd, E)) once
        # Mosaic's dot_general lowering handles multiple contracting dims.
        ctx = ctx.reshape(bt, num_heads, seq, head_dim).astype(compute_dtype)
        ctx = jnp.transpose(ctx, (0, 2, 1, 3)).reshape(rows, embed_dim)

        # ---- attention output projection + residual (f32 math)
        attn = jnp.dot(ctx, wo_ref[...],
                       preferred_element_type=jnp.float32) + bo_ref[...]
        x1 = x_f32 + attn

        # ---- feed-forward (ReLU) + residual; bias-add + ReLU fused and h cast
        #      immediately so no (rows, H) f32 temp stays live.
        # TODO(synk): stream w1/w2 over an 'arbitrary' reduction grid axis with
        # a VMEM f32 accumulator when resident weights exceed ~16-20 MiB.
        # TODO(synk): on v7x, optionally quantize w1/w2/wo to fp8 (f32 accum).
        h = jnp.maximum(
            jnp.dot(x1.astype(compute_dtype), w1_ref[...],
                    preferred_element_type=jnp.float32) + b1_ref[...],
            0.0).astype(compute_dtype)
        ff = jnp.dot(h, w2_ref[...],
                     preferred_element_type=jnp.float32) + b2_ref[...]

        o_ref[...] = (x1 + ff).reshape(bt, seq, embed_dim).astype(o_ref.dtype)

    return kernel


def _chip_policy():
    """VMEM cap / batch-tile policy derived from physical VMEM per TensorCore."""
    try:
        phys = int(pltpu.get_tpu_info().vmem_capacity_bytes)
    except Exception:
        phys = 64 * _MiB                      # conservative default (v7x-like)
    if phys >= 96 * _MiB:
        # v5e / v6e: 128 MiB physical VMEM, single TensorCore per chip.
        cap = min(phys - 24 * _MiB, 100 * _MiB)
        prefer_multi_step = False             # extra grid steps are purely serial
        target_rows = 512
    else:
        # v7x-like: 64 MiB physical per TC, 2 TCs share the grid.
        cap = max(min(48 * _MiB, phys - 16 * _MiB), 16 * _MiB)
        prefer_multi_step = True              # keep >=2 (ideally even) grid steps
        target_rows = 256
    return cap, prefer_multi_step, target_rows


def _vmem_estimate(bt, seq, E, H, NH, compute_dtype, single_buffer_weights):
    rows = bt * seq
    ci = jnp.dtype(compute_dtype).itemsize
    wmul = 1 if single_buffer_weights else 2
    wbytes = (E * 3 * E + E * E + E * H + H * E) * ci * wmul
    bbytes = (3 * E + 2 * E + H) * 4 * wmul
    iobytes = 2 * 2 * rows * E * 4                      # x + out, double-buffered
    ibytes = (rows * (3 * E + 2 * E + H) + 2 * bt * NH * seq * seq + rows * E) * 4
    return wbytes + bbytes + iobytes + ibytes + 4 * _MiB  # + Mosaic scratch headroom


def _pick_batch_tile(batch, seq, *, target_rows, prefer_multi_step, fits_budget):
    divs = [d for d in range(1, batch + 1) if batch % d == 0]
    cands = [d for d in divs if d * seq <= target_rows and fits_budget(d)] or [1]
    best = max(cands)
    if prefer_multi_step:
        even = [d for d in cands if batch // d >= 2 and (batch // d) % 2 == 0]
        multi = [d for d in cands if batch // d >= 2]
        if even:
            best = max(even)
        elif multi:
            best = max(multi)
    return best


def prepare_params(params, num_heads, compute_dtype=jnp.bfloat16):
    """One-time parameter prep (QKV fusion, scale folding, casts), hoisted out
    of the forward path so no per-call concat/cast HBM traffic is emitted."""
    E = params["wq"].shape[0]
    assert E % num_heads == 0
    scale = 1.0 / math.sqrt(E // num_heads)
    wqkv = jnp.concatenate(
        [params["wq"] * scale, params["wk"], params["wv"]], axis=1)
    bqkv = jnp.concatenate(
        [params["bq"] * scale, params["bk"], params["bv"]], axis=1)
    return {
        "num_heads": num_heads,
        "compute_dtype": compute_dtype,
        "wqkv": wqkv.astype(compute_dtype),
        "bqkv": bqkv.astype(jnp.float32),   # biases add after f32 accumulation
        "wo": params["wo"].astype(compute_dtype),
        "bo": params["bo"].astype(jnp.float32),
        "w1": params["w1"].astype(compute_dtype),
        "b1": params["b1"].astype(jnp.float32),
        "w2": params["w2"].astype(compute_dtype),
        "b2": params["b2"].astype(jnp.float32),
    }


def transformer_layer(x, prepared):
    """x: (B, S, E) float32; prepared: output of prepare_params()."""
    B, S, E = x.shape
    num_heads = prepared["num_heads"]
    c = prepared["compute_dtype"]
    H = prepared["w1"].shape[1]

    cap, prefer_multi_step, target_rows = _chip_policy()
    bt = _pick_batch_tile(
        B, S, target_rows=target_rows, prefer_multi_step=prefer_multi_step,
        fits_budget=lambda d: _vmem_estimate(d, S, E, H, num_heads, c, True) <= cap)
    grid = (B // bt,)

    kernel = make_transformer_layer_kernel(
        bt, S, E, num_heads, H, c, approx_recip=(c != jnp.float32))

    args = (x.astype(jnp.float32),
            prepared["wqkv"], prepared["bqkv"],
            prepared["wo"], prepared["bo"],
            prepared["w1"], prepared["b1"],
            prepared["w2"], prepared["b2"])

    def _run(single_buffer_weights):
        spec_kw = ({"pipeline_mode": pl.Buffered(1)}
                   if single_buffer_weights else {})

        def const_spec(shape):
            # Whole (untiled) parameter; constant block index => fetched once,
            # and (when supported) held in a single pipeline buffer.
            zeros = (0,) * len(shape)
            return pl.BlockSpec(shape, lambda b, z=zeros: z, **spec_kw)

        in_specs = [
            pl.BlockSpec((bt, S, E), lambda b: (b, 0, 0)),        # x (pipelined)
            const_spec((E, 3 * E)), const_spec((1, 3 * E)),       # wqkv, bqkv
            const_spec((E, E)), const_spec((1, E)),               # wo, bo
            const_spec((E, H)), const_spec((1, H)),               # w1, b1
            const_spec((H, E)), const_spec((1, E)),               # w2, b2
        ]
        out_spec = pl.BlockSpec((bt, S, E), lambda b: (b, 0, 0))

        needed = _vmem_estimate(bt, S, E, H, num_heads, c, single_buffer_weights)
        vmem_limit = int(min(max(needed, 32 * _MiB), cap))

        return pl.pallas_call(
            kernel,
            out_shape=jax.ShapeDtypeStruct((B, S, E), jnp.float32),
            grid_spec=pltpu.PrefetchScalarGridSpec(
                num_scalar_prefetch=0,
                grid=grid,
                in_specs=in_specs,
                out_specs=out_spec,
            ),
            compiler_params=pltpu.CompilerParams(
                dimension_semantics=("parallel",),
                vmem_limit_bytes=vmem_limit,
            ),
        )(*args)

    try:
        # Single-buffer the constant-index weight/bias blocks (their block
        # never changes, so a second pipeline buffer is wasted VMEM).
        return _run(True)
    except Exception:
        # Fallback for jax/Mosaic versions that reject pipeline_mode here.
        return _run(False)


def reference_transformer_layer(x, params, num_heads):
    """Pure-JAX f32 reference matching torch.nn.MultiheadAttention + FFN."""
    B, S, E = x.shape
    hd = E // num_heads
    scale = 1.0 / math.sqrt(hd)

    q = x @ params["wq"] + params["bq"][0]
    k = x @ params["wk"] + params["bk"][0]
    v = x @ params["wv"] + params["bv"][0]

    def split(t):  # (B,S,E) -> (B,nH,S,hd)
        return t.reshape(B, S, num_heads, hd).transpose(0, 2, 1, 3)

    qh, kh, vh = split(q), split(k), split(v)
    s = jnp.einsum("bhqd,bhkd->bhqk", qh, kh) * scale
    p = jax.nn.softmax(s, axis=-1)
    ctx = jnp.einsum("bhqk,bhkd->bhqd", p, vh)
    ctx = ctx.transpose(0, 2, 1, 3).reshape(B, S, E)
    attn = ctx @ params["wo"] + params["bo"][0]

    x1 = x + attn
    h = jax.nn.relu(x1 @ params["w1"] + params["b1"][0])
    ff = h @ params["w2"] + params["b2"][0]
    return x1 + ff


def init_params(key, embed_dim, hidden_dim):
    keys = jax.random.split(key, 12)

    def u(k, shape, fan_in):
        bound = 1.0 / math.sqrt(fan_in)
        return jax.random.uniform(k, shape, jnp.float32, -bound, bound)

    return {
        # attention in/out projections, stored as (in, out)
        "wq": u(keys[0], (embed_dim, embed_dim), embed_dim),
        "wk": u(keys[1], (embed_dim, embed_dim), embed_dim),
        "wv": u(keys[2], (embed_dim, embed_dim), embed_dim),
        "wo": u(keys[3], (embed_dim, embed_dim), embed_dim),
        "bq": u(keys[4], (1, embed_dim), embed_dim),
        "bk": u(keys[5], (1, embed_dim), embed_dim),
        "bv": u(keys[6], (1, embed_dim), embed_dim),
        "bo": u(keys[7], (1, embed_dim), embed_dim),
        # FFN
        "w1": u(keys[8], (embed_dim, hidden_dim), embed_dim),
        "b1": u(keys[9], (1, hidden_dim), embed_dim),
        "w2": u(keys[10], (hidden_dim, embed_dim), hidden_dim),
        "b2": u(keys[11], (1, embed_dim), hidden_dim),
    }


if __name__ == "__main__":
    B, S, E, NH, H = 2, 8, 32, 4, 64

    key = jax.random.PRNGKey(0)
    kx, kp = jax.random.split(key)
    x = jax.random.normal(kx, (B, S, E), jnp.float32)
    params = init_params(kp, E, H)

    ref = reference_transformer_layer(x, params, NH)

    # Exact-math path (f32 MXU operands, exact reciprocal): tight tolerance.
    prepared_f32 = prepare_params(params, NH, compute_dtype=jnp.float32)
    out_f32 = jax.block_until_ready(transformer_layer(x, prepared_f32))
    assert out_f32.shape == (B, S, E)
    assert jnp.allclose(out_f32, ref, atol=1e-4, rtol=1e-4), "f32 mismatch"

    # bf16-operand path (f32 accumulation / softmax / residuals): looser tol.
    prepared_bf16 = prepare_params(params, NH, compute_dtype=jnp.bfloat16)
    out_bf16 = jax.block_until_ready(transformer_layer(x, prepared_bf16))
    assert out_bf16.shape == (B, S, E)
    assert jnp.allclose(out_bf16, ref, atol=5e-2, rtol=5e-2), "bf16 mismatch"

    print("KERNEL_OK")
</pallas_src>

<mosaic_0001>
module attributes {stable_mosaic.version = 11 : i64} {
  func.func @kernel(%arg0: i32, %arg1: memref<1x8x32xf32, #tpu.memory_space<vmem>>, %arg2: memref<32x96xf32, #tpu.memory_space<vmem>>, %arg3: memref<1x96xf32, #tpu.memory_space<vmem>>, %arg4: memref<32x32xf32, #tpu.memory_space<vmem>>, %arg5: memref<1x32xf32, #tpu.memory_space<vmem>>, %arg6: memref<32x64xf32, #tpu.memory_space<vmem>>, %arg7: memref<1x64xf32, #tpu.memory_space<vmem>>, %arg8: memref<64x32xf32, #tpu.memory_space<vmem>>, %arg9: memref<1x32xf32, #tpu.memory_space<vmem>>, %arg10: memref<1x8x32xf32, #tpu.memory_space<vmem>>) attributes {dimension_semantics = [#tpu.dimension_semantics<parallel>], iteration_bounds = array<i64: 2>, scalar_prefetch = 0 : i64, scratch_operands = 0 : i64, tpu.core_type = #tpu.core_type<tc>, window_params = [{transform_indices = @transform_0, window_bounds = array<i64: 1, 8, 32>}, {pipeline_mode = #tpu.pipeline_mode<synchronous>, transform_indices = @transform_1, window_bounds = array<i64: 32, 96>}, {pipeline_mode = #tpu.pipeline_mode<synchronous>, transform_indices = @transform_2, window_bounds = array<i64: 1, 96>}, {pipeline_mode = #tpu.pipeline_mode<synchronous>, transform_indices = @transform_3, window_bounds = array<i64: 32, 32>}, {pipeline_mode = #tpu.pipeline_mode<synchronous>, transform_indices = @transform_4, window_bounds = array<i64: 1, 32>}, {pipeline_mode = #tpu.pipeline_mode<synchronous>, transform_indices = @transform_5, window_bounds = array<i64: 32, 64>}, {pipeline_mode = #tpu.pipeline_mode<synchronous>, transform_indices = @transform_6, window_bounds = array<i64: 1, 64>}, {pipeline_mode = #tpu.pipeline_mode<synchronous>, transform_indices = @transform_7, window_bounds = array<i64: 64, 32>}, {pipeline_mode = #tpu.pipeline_mode<synchronous>, transform_indices = @transform_8, window_bounds = array<i64: 1, 32>}, {transform_indices = @transform_9, window_bounds = array<i64: 1, 8, 32>}]} {
    %c0 = arith.constant 0 : index
    %c0_0 = arith.constant 0 : index
    %c0_1 = arith.constant 0 : index
    %0 = vector.load %arg1[%c0, %c0_0, %c0_1] : memref<1x8x32xf32, #tpu.memory_space<vmem>>, vector<1x8x32xf32>
    %1 = vector.shape_cast %0 : vector<1x8x32xf32> to vector<8x32xf32>
    %c0_2 = arith.constant 0 : index
    %c0_3 = arith.constant 0 : index
    %2 = vector.load %arg2[%c0_2, %c0_3] : memref<32x96xf32, #tpu.memory_space<vmem>>, vector<32x96xf32>
    %cst = arith.constant dense<0.000000e+00> : vector<8x96xf32>
    %3 = tpu.matmul %1, %2, %cst {dimension_numbers = #tpu.dot_dimension_numbers<[1], [0], [0], [1], [0, 0, 1, 1], [], []>} : vector<8x32xf32>, vector<32x96xf32>, vector<8x96xf32> -> vector<8x96xf32>
    %c0_4 = arith.constant 0 : index
    %c0_5 = arith.constant 0 : index
    %4 = vector.load %arg3[%c0_4, %c0_5] : memref<1x96xf32, #tpu.memory_space<vmem>>, vector<1x96xf32>
    %5 = vector.broadcast %4 : vector<1x96xf32> to vector<8x96xf32>
    %6 = arith.addf %3, %5 : vector<8x96xf32>
    %7 = vector.extract_strided_slice %6 {offsets = [0, 0], sizes = [8, 32], strides = [1, 1]} : vector<8x96xf32> to vector<8x32xf32>
    %8 = vector.shape_cast %7 : vector<8x32xf32> to vector<1x8x4x8xf32>
    %9 = tpu.transpose %8, [0, 2, 1, 3] : vector<1x8x4x8xf32> -> vector<1x4x8x8xf32>
    %10 = vector.shape_cast %9 : vector<1x4x8x8xf32> to vector<4x8x8xf32>
    %11 = vector.extract_strided_slice %6 {offsets = [0, 32], sizes = [8, 32], strides = [1, 1]} : vector<8x96xf32> to vector<8x32xf32>
    %12 = vector.shape_cast %11 : vector<8x32xf32> to vector<1x8x4x8xf32>
    %13 = tpu.transpose %12, [0, 2, 1, 3] : vector<1x8x4x8xf32> -> vector<1x4x8x8xf32>
    %14 = vector.shape_cast %13 : vector<1x4x8x8xf32> to vector<4x8x8xf32>
    %15 = vector.extract_strided_slice %6 {offsets = [0, 64], sizes = [8, 32], strides = [1, 1]} : vector<8x96xf32> to vector<8x32xf32>
    %16 = vector.shape_cast %15 : vector<8x32xf32> to vector<1x8x4x8xf32>
    %17 = tpu.transpose %16, [0, 2, 1, 3] : vector<1x8x4x8xf32> -> vector<1x4x8x8xf32>
    %18 = vector.shape_cast %17 : vector<1x4x8x8xf32> to vector<4x8x8xf32>
    "tpu.trace_start"() <{level = 10 : i32, message = "bqd,bkd->bqk"}> : () -> ()
    %cst_6 = arith.constant dense<0.000000e+00> : vector<4x8x8xf32>
    %19 = tpu.matmul %10, %14, %cst_6 {dimension_numbers = #tpu.dot_dimension_numbers<[2], [2], [1], [1], [0, 0, 0, 1, 1, 1], [0], [0]>} : vector<4x8x8xf32>, vector<4x8x8xf32>, vector<4x8x8xf32> -> vector<4x8x8xf32>
    "tpu.trace_stop"() : () -> ()
    %cst_7 = arith.constant dense<0xFF800000> : vector<4x8xf32>
    %20 = vector.multi_reduction <maximumf>, %19, %cst_7 [2] : vector<4x8x8xf32> to vector<4x8xf32>
    %21 = vector.shape_cast %20 : vector<4x8xf32> to vector<4x8x1xf32>
    %22 = vector.broadcast %21 : vector<4x8x1xf32> to vector<4x8x8xf32>
    %23 = arith.subf %19, %22 : vector<4x8x8xf32>
    %24 = math.exp %23 : vector<4x8x8xf32>
    %cst_8 = arith.constant dense<0.000000e+00> : vector<4x8xf32>
    %25 = vector.multi_reduction <add>, %24, %cst_8 [2] : vector<4x8x8xf32> to vector<4x8xf32>
    %26 = vector.shape_cast %25 : vector<4x8xf32> to vector<4x8x1xf32>
    %27 = tpu.reciprocal %26 : vector<4x8x1xf32> -> vector<4x8x1xf32>
    %28 = vector.broadcast %27 : vector<4x8x1xf32> to vector<4x8x8xf32>
    %29 = arith.mulf %24, %28 : vector<4x8x8xf32>
    "tpu.trace_start"() <{level = 10 : i32, message = "bqk,bkd->bqd"}> : () -> ()
    %cst_9 = arith.constant dense<0.000000e+00> : vector<4x8x8xf32>
    %30 = tpu.matmul %29, %18, %cst_9 {dimension_numbers = #tpu.dot_dimension_numbers<[2], [1], [1], [2], [0, 0, 0, 1, 1, 2], [0], [0]>} : vector<4x8x8xf32>, vector<4x8x8xf32>, vector<4x8x8xf32> -> vector<4x8x8xf32>
    "tpu.trace_stop"() : () -> ()
    %31 = vector.shape_cast %30 : vector<4x8x8xf32> to vector<1x4x8x8xf32>
    %32 = tpu.transpose %31, [0, 2, 1, 3] : vector<1x4x8x8xf32> -> vector<1x8x4x8xf32>
    %33 = vector.shape_cast %32 : vector<1x8x4x8xf32> to vector<8x32xf32>
    %c0_10 = arith.constant 0 : index
    %c0_11 = arith.constant 0 : index
    %34 = vector.load %arg4[%c0_10, %c0_11] : memref<32x32xf32, #tpu.memory_space<vmem>>, vector<32x32xf32>
    %cst_12 = arith.constant dense<0.000000e+00> : vector<8x32xf32>
    %35 = tpu.matmul %33, %34, %cst_12 {dimension_numbers = #tpu.dot_dimension_numbers<[1], [0], [0], [1], [0, 0, 1, 1], [], []>} : vector<8x32xf32>, vector<32x32xf32>, vector<8x32xf32> -> vector<8x32xf32>
    %c0_13 = arith.constant 0 : index
    %c0_14 = arith.constant 0 : index
    %36 = vector.load %arg5[%c0_13, %c0_14] : memref<1x32xf32, #tpu.memory_space<vmem>>, vector<1x32xf32>
    %37 = vector.broadcast %36 : vector<1x32xf32> to vector<8x32xf32>
    %38 = arith.addf %35, %37 : vector<8x32xf32>
    %39 = arith.addf %1, %38 : vector<8x32xf32>
    %c0_15 = arith.constant 0 : index
    %c0_16 = arith.constant 0 : index
    %40 = vector.load %arg6[%c0_15, %c0_16] : memref<32x64xf32, #tpu.memory_space<vmem>>, vector<32x64xf32>
    %cst_17 = arith.constant dense<0.000000e+00> : vector<8x64xf32>
    %41 = tpu.matmul %39, %40, %cst_17 {dimension_numbers = #tpu.dot_dimension_numbers<[1], [0], [0], [1], [0, 0, 1, 1], [], []>} : vector<8x32xf32>, vector<32x64xf32>, vector<8x64xf32> -> vector<8x64xf32>
    %c0_18 = arith.constant 0 : index
    %c0_19 = arith.constant 0 : index
    %42 = vector.load %arg7[%c0_18, %c0_19] : memref<1x64xf32, #tpu.memory_space<vmem>>, vector<1x64xf32>
    %43 = vector.broadcast %42 : vector<1x64xf32> to vector<8x64xf32>
    %44 = arith.addf %41, %43 : vector<8x64xf32>
    %cst_20 = arith.constant 0.000000e+00 : f32
    %45 = vector.broadcast %cst_20 : f32 to vector<8x64xf32>
    %46 = arith.maximumf %44, %45 : vector<8x64xf32>
    %c0_21 = arith.constant 0 : index
    %c0_22 = arith.constant 0 : index
    %47 = vector.load %arg8[%c0_21, %c0_22] : memref<64x32xf32, #tpu.memory_space<vmem>>, vector<64x32xf32>
    %cst_23 = arith.constant dense<0.000000e+00> : vector<8x32xf32>
    %48 = tpu.matmul %46, %47, %cst_23 {dimension_numbers = #tpu.dot_dimension_numbers<[1], [0], [0], [1], [0, 0, 1, 1], [], []>} : vector<8x64xf32>, vector<64x32xf32>, vector<8x32xf32> -> vector<8x32xf32>
    %c0_24 = arith.constant 0 : index
    %c0_25 = arith.constant 0 : index
    %49 = vector.load %arg9[%c0_24, %c0_25] : memref<1x32xf32, #tpu.memory_space<vmem>>, vector<1x32xf32>
    %50 = vector.broadcast %49 : vector<1x32xf32> to vector<8x32xf32>
    %51 = arith.addf %48, %50 : vector<8x32xf32>
    %52 = arith.addf %39, %51 : vector<8x32xf32>
    %53 = vector.shape_cast %52 : vector<8x32xf32> to vector<1x8x32xf32>
    %c0_26 = arith.constant 0 : index
    %c0_27 = arith.constant 0 : index
    %c0_28 = arith.constant 0 : index
    %54 = vector.load %arg10[%c0_26, %c0_27, %c0_28] : memref<1x8x32xf32, #tpu.memory_space<vmem>>, vector<1x8x32xf32>
    tpu.vector_store %arg10[%c0_26, %c0_27, %c0_28], %53 {strides = array<i32>} : memref<1x8x32xf32, #tpu.memory_space<vmem>>, vector<1x8x32xf32>,
    return
  }
  func.func @transform_0(%arg0: i32) -> (i32, i32, i32) {
    %c0_i32 = arith.constant 0 : i32
    %c0_i32_0 = arith.constant 0 : i32
    %c0_i32_1 = arith.constant 0 : i32
    return %arg0, %c0_i32, %c0_i32_0 : i32, i32, i32
  }
  func.func @transform_1(%arg0: i32) -> (i32, i32) {
    %c0_i32 = arith.constant 0 : i32
    %c0_i32_0 = arith.constant 0 : i32
    %c0_i32_1 = arith.constant 0 : i32
    return %c0_i32, %c0_i32_0 : i32, i32
  }
  func.func @transform_2(%arg0: i32) -> (i32, i32) {
    %c0_i32 = arith.constant 0 : i32
    %c0_i32_0 = arith.constant 0 : i32
    %c0_i32_1 = arith.constant 0 : i32
    return %c0_i32, %c0_i32_0 : i32, i32
  }
  func.func @transform_3(%arg0: i32) -> (i32, i32) {
    %c0_i32 = arith.constant 0 : i32
    %c0_i32_0 = arith.constant 0 : i32
    %c0_i32_1 = arith.constant 0 : i32
    return %c0_i32, %c0_i32_0 : i32, i32
  }
  func.func @transform_4(%arg0: i32) -> (i32, i32) {
    %c0_i32 = arith.constant 0 : i32
    %c0_i32_0 = arith.constant 0 : i32
    %c0_i32_1 = arith.constant 0 : i32
    return %c0_i32, %c0_i32_0 : i32, i32
  }
  func.func @transform_5(%arg0: i32) -> (i32, i32) {
    %c0_i32 = arith.constant 0 : i32
    %c0_i32_0 = arith.constant 0 : i32
    %c0_i32_1 = arith.constant 0 : i32
    return %c0_i32, %c0_i32_0 : i32, i32
  }
  func.func @transform_6(%arg0: i32) -> (i32, i32) {
    %c0_i32 = arith.constant 0 : i32
    %c0_i32_0 = arith.constant 0 : i32
    %c0_i32_1 = arith.constant 0 : i32
    return %c0_i32, %c0_i32_0 : i32, i32
  }
  func.func @transform_7(%arg0: i32) -> (i32, i32) {
    %c0_i32 = arith.constant 0 : i32
    %c0_i32_0 = arith.constant 0 : i32
    %c0_i32_1 = arith.constant 0 : i32
    return %c0_i32, %c0_i32_0 : i32, i32
  }
  func.func @transform_8(%arg0: i32) -> (i32, i32) {
    %c0_i32 = arith.constant 0 : i32
    %c0_i32_0 = arith.constant 0 : i32
    %c0_i32_1 = arith.constant 0 : i32
    return %c0_i32, %c0_i32_0 : i32, i32
  }
  func.func @transform_9(%arg0: i32) -> (i32, i32, i32) {
    %c0_i32 = arith.constant 0 : i32
    %c0_i32_0 = arith.constant 0 : i32
    %c0_i32_1 = arith.constant 0 : i32
    return %arg0, %c0_i32, %c0_i32_0 : i32, i32, i32
  }
}

module attributes {stable_mosaic.version = 11 : i64} {
  func.func @kernel(%arg0: i32, %arg1: memref<1x8x32xf32, #tpu.memory_space<vmem>>, %arg2: memref<32x96xf32, #tpu.memory_space<vmem>>, %arg3: memref<1x96xf32, #tpu.memory_space<vmem>>, %arg4: memref<32x32xf32, #tpu.memory_space<vmem>>, %arg5: memref<1x32xf32, #tpu.memory_space<vmem>>, %arg6: memref<32x64xf32, #tpu.memory_space<vmem>>, %arg7: memref<1x64xf32, #tpu.memory_space<vmem>>, %arg8: memref<64x32xf32, #tpu.memory_space<vmem>>, %arg9: memref<1x32xf32, #tpu.memory_space<vmem>>, %arg10: memref<1x8x32xf32, #tpu.memory_space<vmem>>) attributes {dimension_semantics = [#tpu.dimension_semantics<parallel>], iteration_bounds = array<i64: 2>, scalar_prefetch = 0 : i64, scratch_operands = 0 : i64, tpu.core_type = #tpu.core_type<tc>, window_params = [{transform_indices = @transform_0, window_bounds = array<i64: 1, 8, 32>}, {pipeline_mode = #tpu.pipeline_mode<synchronous>, transform_indices = @transform_1, window_bounds = array<i64: 32, 96>}, {pipeline_mode = #tpu.pipeline_mode<synchronous>, transform_indices = @transform_2, window_bounds = array<i64: 1, 96>}, {pipeline_mode = #tpu.pipeline_mode<synchronous>, transform_indices = @transform_3, window_bounds = array<i64: 32, 32>}, {pipeline_mode = #tpu.pipeline_mode<synchronous>, transform_indices = @transform_4, window_bounds = array<i64: 1, 32>}, {pipeline_mode = #tpu.pipeline_mode<synchronous>, transform_indices = @transform_5, window_bounds = array<i64: 32, 64>}, {pipeline_mode = #tpu.pipeline_mode<synchronous>, transform_indices = @transform_6, window_bounds = array<i64: 1, 64>}, {pipeline_mode = #tpu.pipeline_mode<synchronous>, transform_indices = @transform_7, window_bounds = array<i64: 64, 32>}, {pipeline_mode = #tpu.pipeline_mode<synchronous>, transform_indices = @transform_8, window_bounds = array<i64: 1, 32>}, {transform_indices = @transform_9, window_bounds = array<i64: 1, 8, 32>}]} {
    %c0 = arith.constant 0 : index
    %c0_0 = arith.constant 0 : index
    %c0_1 = arith.constant 0 : index
    %0 = vector.load %arg1[%c0, %c0_0, %c0_1] : memref<1x8x32xf32, #tpu.memory_space<vmem>>, vector<1x8x32xf32>
    %1 = vector.shape_cast %0 : vector<1x8x32xf32> to vector<8x32xf32>
    %c0_2 = arith.constant 0 : index
    %c0_3 = arith.constant 0 : index
    %2 = vector.load %arg2[%c0_2, %c0_3] : memref<32x96xf32, #tpu.memory_space<vmem>>, vector<32x96xf32>
    %cst = arith.constant dense<0.000000e+00> : vector<8x96xf32>
    %3 = tpu.matmul %1, %2, %cst {dimension_numbers = #tpu.dot_dimension_numbers<[1], [0], [0], [1], [0, 0, 1, 1], [], []>} : vector<8x32xf32>, vector<32x96xf32>, vector<8x96xf32> -> vector<8x96xf32>
    %c0_4 = arith.constant 0 : index
    %c0_5 = arith.constant 0 : index
    %4 = vector.load %arg3[%c0_4, %c0_5] : memref<1x96xf32, #tpu.memory_space<vmem>>, vector<1x96xf32>
    %5 = vector.broadcast %4 : vector<1x96xf32> to vector<8x96xf32>
    %6 = arith.addf %3, %5 : vector<8x96xf32>
    %7 = vector.extract_strided_slice %6 {offsets = [0, 0], sizes = [8, 32], strides = [1, 1]} : vector<8x96xf32> to vector<8x32xf32>
    %8 = vector.shape_cast %7 : vector<8x32xf32> to vector<1x8x4x8xf32>
    %9 = tpu.transpose %8, [0, 2, 1, 3] : vector<1x8x4x8xf32> -> vector<1x4x8x8xf32>
    %10 = vector.shape_cast %9 : vector<1x4x8x8xf32> to vector<4x8x8xf32>
    %11 = vector.extract_strided_slice %6 {offsets = [0, 32], sizes = [8, 32], strides = [1, 1]} : vector<8x96xf32> to vector<8x32xf32>
    %12 = vector.shape_cast %11 : vector<8x32xf32> to vector<1x8x4x8xf32>
    %13 = tpu.transpose %12, [0, 2, 1, 3] : vector<1x8x4x8xf32> -> vector<1x4x8x8xf32>
    %14 = vector.shape_cast %13 : vector<1x4x8x8xf32> to vector<4x8x8xf32>
    %15 = vector.extract_strided_slice %6 {offsets = [0, 64], sizes = [8, 32], strides = [1, 1]} : vector<8x96xf32> to vector<8x32xf32>
    %16 = vector.shape_cast %15 : vector<8x32xf32> to vector<1x8x4x8xf32>
    %17 = tpu.transpose %16, [0, 2, 1, 3] : vector<1x8x4x8xf32> -> vector<1x4x8x8xf32>
    %18 = vector.shape_cast %17 : vector<1x4x8x8xf32> to vector<4x8x8xf32>
    "tpu.trace_start"() <{level = 10 : i32, message = "bqd,bkd->bqk"}> : () -> ()
    %cst_6 = arith.constant dense<0.000000e+00> : vector<4x8x8xf32>
    %19 = tpu.matmul %10, %14, %cst_6 {dimension_numbers = #tpu.dot_dimension_numbers<[2], [2], [1], [1], [0, 0, 0, 1, 1, 1], [0], [0]>} : vector<4x8x8xf32>, vector<4x8x8xf32>, vector<4x8x8xf32> -> vector<4x8x8xf32>
    "tpu.trace_stop"() : () -> ()
    %cst_7 = arith.constant dense<0xFF800000> : vector<4x8xf32>
    %20 = vector.multi_reduction <maximumf>, %19, %cst_7 [2] : vector<4x8x8xf32> to vector<4x8xf32>
    %21 = vector.shape_cast %20 : vector<4x8xf32> to vector<4x8x1xf32>
    %22 = vector.broadcast %21 : vector<4x8x1xf32> to vector<4x8x8xf32>
    %23 = arith.subf %19, %22 : vector<4x8x8xf32>
    %24 = math.exp %23 : vector<4x8x8xf32>
    %cst_8 = arith.constant dense<0.000000e+00> : vector<4x8xf32>
    %25 = vector.multi_reduction <add>, %24, %cst_8 [2] : vector<4x8x8xf32> to vector<4x8xf32>
    %26 = vector.shape_cast %25 : vector<4x8xf32> to vector<4x8x1xf32>
    %27 = tpu.reciprocal %26 : vector<4x8x1xf32> -> vector<4x8x1xf32>
    %28 = vector.broadcast %27 : vector<4x8x1xf32> to vector<4x8x8xf32>
    %29 = arith.mulf %24, %28 : vector<4x8x8xf32>
    "tpu.trace_start"() <{level = 10 : i32, message = "bqk,bkd->bqd"}> : () -> ()
    %cst_9 = arith.constant dense<0.000000e+00> : vector<4x8x8xf32>
    %30 = tpu.matmul %29, %18, %cst_9 {dimension_numbers = #tpu.dot_dimension_numbers<[2], [1], [1], [2], [0, 0, 0, 1, 1, 2], [0], [0]>} : vector<4x8x8xf32>, vector<4x8x8xf32>, vector<4x8x8xf32> -> vector<4x8x8xf32>
    "tpu.trace_stop"() : () -> ()
    %31 = vector.shape_cast %30 : vector<4x8x8xf32> to vector<1x4x8x8xf32>
    %32 = tpu.transpose %31, [0, 2, 1, 3] : vector<1x4x8x8xf32> -> vector<1x8x4x8xf32>
    %33 = vector.shape_cast %32 : vector<1x8x4x8xf32> to vector<8x32xf32>
    %c0_10 = arith.constant 0 : index
    %c0_11 = arith.constant 0 : index
    %34 = vector.load %arg4[%c0_10, %c0_11] : memref<32x32xf32, #tpu.memory_space<vmem>>, vector<32x32xf32>
    %cst_12 = arith.constant dense<0.000000e+00> : vector<8x32xf32>
    %35 = tpu.matmul %33, %34, %cst_12 {dimension_numbers = #tpu.dot_dimension_numbers<[1], [0], [0], [1], [0, 0, 1, 1], [], []>} : vector<8x32xf32>, vector<32x32xf32>, vector<8x32xf32> -> vector<8x32xf32>
    %c0_13 = arith.constant 0 : index
    %c0_14 = arith.constant 0 : index
    %36 = vector.load %arg5[%c0_13, %c0_14] : memref<1x32xf32, #tpu.memory_space<vmem>>, vector<1x32xf32>
    %37 = vector.broadcast %36 : vector<1x32xf32> to vector<8x32xf32>
    %38 = arith.addf %35, %37 : vector<8x32xf32>
    %39 = arith.addf %1, %38 : vector<8x32xf32>
    %c0_15 = arith.constant 0 : index
    %c0_16 = arith.constant 0 : index
    %40 = vector.load %arg6[%c0_15, %c0_16] : memref<32x64xf32, #tpu.memory_space<vmem>>, vector<32x64xf32>
    %cst_17 = arith.constant dense<0.000000e+00> : vector<8x64xf32>
    %41 = tpu.matmul %39, %40, %cst_17 {dimension_numbers = #tpu.dot_dimension_numbers<[1], [0], [0], [1], [0, 0, 1, 1], [], []>} : vector<8x32xf32>, vector<32x64xf32>, vector<8x64xf32> -> vector<8x64xf32>
    %c0_18 = arith.constant 0 : index
    %c0_19 = arith.constant 0 : index
    %42 = vector.load %arg7[%c0_18, %c0_19] : memref<1x64xf32, #tpu.memory_space<vmem>>, vector<1x64xf32>
    %43 = vector.broadcast %42 : vector<1x64xf32> to vector<8x64xf32>
    %44 = arith.addf %41, %43 : vector<8x64xf32>
    %cst_20 = arith.constant 0.000000e+00 : f32
    %45 = vector.broadcast %cst_20 : f32 to vector<8x64xf32>
    %46 = arith.maximumf %44, %45 : vector<8x64xf32>
    %c0_21 = arith.constant 0 : index
    %c0_22 = arith.constant 0 : index
    %47 = vector.load %arg8[%c0_21, %c0_22] : memref<64x32xf32, #tpu.memory_space<vmem>>, vector<64x32xf32>
    %cst_23 = arith.constant dense<0.000000e+00> : vector<8x32xf32>
    %48 = tpu.matmul %46, %47, %cst_23 {dimension_numbers = #tpu.dot_dimension_numbers<[1], [0], [0], [1], [0, 0, 1, 1], [], []>} : vector<8x64xf32>, vector<64x32xf32>, vector<8x32xf32> -> vector<8x32xf32>
    %c0_24 = arith.constant 0 : index
    %c0_25 = arith.constant 0 : index
    %49 = vector.load %arg9[%c0_24, %c0_25] : memref<1x32xf32, #tpu.memory_space<vmem>>, vector<1x32xf32>
    %50 = vector.broadcast %49 : vector<1x32xf32> to vector<8x32xf32>
    %51 = arith.addf %48, %50 : vector<8x32xf32>
    %52 = arith.addf %39, %51 : vector<8x32xf32>
    %53 = vector.shape_cast %52 : vector<8x32xf32> to vector<1x8x32xf32>
    %c0_26 = arith.constant 0 : index
    %c0_27 = arith.constant 0 : index
    %c0_28 = arith.constant 0 : index
    %54 = vector.load %arg10[%c0_26, %c0_27, %c0_28] : memref<1x8x32xf32, #tpu.memory_space<vmem>>, vector<1x8x32xf32>
    tpu.vector_store %arg10[%c0_26, %c0_27, %c0_28], %53 {strides = array<i32>} : memref<1x8x32xf32, #tpu.memory_space<vmem>>, vector<1x8x32xf32>,
    return
  }
  func.func @transform_0(%arg0: i32) -> (i32, i32, i32) {
    %c0_i32 = arith.constant 0 : i32
    %c0_i32_0 = arith.constant 0 : i32
    %c0_i32_1 = arith.constant 0 : i32
    return %arg0, %c0_i32, %c0_i32_0 : i32, i32, i32
  }
  func.func @transform_1(%arg0: i32) -> (i32, i32) {
    %c0_i32 = arith.constant 0 : i32
    %c0_i32_0 = arith.constant 0 : i32
    %c0_i32_1 = arith.constant 0 : i32
    return %c0_i32, %c0_i32_0 : i32, i32
  }
  func.func @transform_2(%arg0: i32) -> (i32, i32) {
    %c0_i32 = arith.constant 0 : i32
    %c0_i32_0 = arith.constant 0 : i32
    %c0_i32_1 = arith.constant 0 : i32
    return %c0_i32, %c0_i32_0 : i32, i32
  }
  func.func @transform_3(%arg0: i32) -> (i32, i32) {
    %c0_i32 = arith.constant 0 : i32
    %c0_i32_0 = arith.constant 0 : i32
    %c0_i32_1 = arith.constant 0 : i32
    return %c0_i32, %c0_i32_0 : i32, i32
  }
  func.func @transform_4(%arg0: i32) -> (i32, i32) {
    %c0_i32 = arith.constant 0 : i32
    %c0_i32_0 = arith.constant 0 : i32
    %c0_i32_1 = arith.constant 0 : i32
    return %c0_i32, %c0_i32_0 : i32, i32
  }
  func.func @transform_5(%arg0: i32) -> (i32, i32) {
    %c0_i32 = arith.constant 0 : i32
    %c0_i32_0 = arith.constant 0 : i32
    %c0_i32_1 = arith.constant 0 : i32
    return %c0_i32, %c0_i32_0 : i32, i32
  }
  func.func @transform_6(%arg0: i32) -> (i32, i32) {
    %c0_i32 = arith.constant 0 : i32
    %c0_i32_0 = arith.constant 0 : i32
    %c0_i32_1 = arith.constant 0 : i32
    return %c0_i32, %c0_i32_0 : i32, i32
  }
  func.func @transform_7(%arg0: i32) -> (i32, i32) {
    %c0_i32 = arith.constant 0 : i32
    %c0_i32_0 = arith.constant 0 : i32
    %c0_i32_1 = arith.constant 0 : i32
    return %c0_i32, %c0_i32_0 : i32, i32
  }
  func.func @transform_8(%arg0: i32) -> (i32, i32) {
    %c0_i32 = arith.constant 0 : i32
    %c0_i32_0 = arith.constant 0 : i32
    %c0_i32_1 = arith.constant 0 : i32
    return %c0_i32, %c0_i32_0 : i32, i32
  }
  func.func @transform_9(%arg0: i32) -> (i32, i32, i32) {
    %c0_i32 = arith.constant 0 : i32
    %c0_i32_0 = arith.constant 0 : i32
    %c0_i32_1 = arith.constant 0 : i32
    return %arg0, %c0_i32, %c0_i32_0 : i32, i32, i32
  }
}

</mosaic_0001>

<llo_original>
// kernel: tpu_custom_call.1
$region0: #{tpu_custom_call.1}
  #allocation0 [shape = 'u32[]', space=smem, size = 0x4, offset = 0x4, fixed_abs, tag = 'smem constant byte address 0x4 - core index']
  #allocation1 [shape = 'u32[72,128]{1,0:T(1,128)}', space=vmem, size = 0x9000, scoped, tag = 'internal scratch']
  %s0 = inlined_call_operand.hbm [shape: f32[2,8,32], index: 0, kind: input, shape index: {}]
  %s1 = inlined_call_operand.vmem [shape: f32[32,96], index: 1, kind: input, shape index: {}]
  %s2 = inlined_call_operand.vmem [shape: f32[1,96], index: 2, kind: input, shape index: {}]
  %s3 = inlined_call_operand.vmem [shape: f32[32,32], index: 3, kind: input, shape index: {}]
  %s4 = inlined_call_operand.vmem [shape: f32[1,32], index: 4, kind: input, shape index: {}]
  %s5 = inlined_call_operand.vmem [shape: f32[32,64], index: 5, kind: input, shape index: {}]
  %s6 = inlined_call_operand.vmem [shape: f32[1,64], index: 6, kind: input, shape index: {}]
  %s7 = inlined_call_operand.vmem [shape: f32[64,32], index: 7, kind: input, shape index: {}]
  %s8 = inlined_call_operand.vmem [shape: f32[1,32], index: 8, kind: input, shape index: {}]
  %s9 = inlined_call_operand.hbm [shape: f32[2,8,32], index: 9, kind: output, shape index: {}]
  %s10 = sld [smem:[#allocation0]]
  $region73: #{tpu_custom_call.1} parent=0
    _
  %s12 = ssub.s32 1, %s10
  %s13 = scalar_select 0, %s12, %s10
  $region1: #{tpu_custom_call.1} parent=0
    #allocation2 [shape = 'u8[8192]{0}', space=vmem, size = 0x2000, scoped, tag = 'input window, operand 0']
    #allocation3 [shape = 's32[2]{0}', space=sflag, size = 0x8, scoped, tag = 'scoped memory for tpu_custom_call.1']
    #allocation4 [shape = 's32[2]{0}', space=sflag, size = 0x8, scoped, tag = 'scoped memory for tpu_custom_call.1']
    #allocation5 [shape = 'u8[8192]{0}', space=vmem, size = 0x2000, scoped, tag = 'output window, operand 0']
    %14 = vsyncpa [#allocation3], 0
    %s15 = scalar_lea.sflag [#allocation3], 1
    %16 = vsyncpa %s15, 0
    %17 = vsyncpa [#allocation4], 0
    %s18 = scalar_lea.sflag [#allocation4], 1
    %19 = vsyncpa %s18, 0
    loop: start=0, step=1, limit=4
    $region2: #{tpu_custom_call.1} parent=1 // loop_pre_header
      _
    $region3: #{tpu_custom_call.1} parent=1 // loop_header
      %s21 = sphi 0, %s25
      %p22 = scmp.ge.s32.totalorder %s21, 4
      %s31 = sphi 0, %s33
      %s34 = sphi 0, %s31
      %s35 = sphi 0, %s34
      %s51 = sphi 0, %s35
      %s55 = sphi 0, %s55
      %s57 = sphi 0, %s55
      %s58 = sphi 0, %s57
      %s72 = sphi 0, %s58
      %s76 = sphi 0, %s76
      %s78 = sphi 0, %s76
      %s79 = sphi 0, %s78
      %s93 = sphi 0, %s79
      %s97 = sphi 0, %s97
      %s99 = sphi 0, %s97
      %s100 = sphi 0, %s99
      %s114 = sphi 0, %s100
      %s118 = sphi 0, %s118
      %s120 = sphi 0, %s118
      %s121 = sphi 0, %s120
      %s135 = sphi 0, %s121
      %s139 = sphi 0, %s139
      %s141 = sphi 0, %s139
      %s142 = sphi 0, %s141
      %s156 = sphi 0, %s142
      %s160 = sphi 0, %s160
      %s162 = sphi 0, %s160
      %s163 = sphi 0, %s162
      %s177 = sphi 0, %s163
      %s181 = sphi 0, %s181
      %s183 = sphi 0, %s181
      %s184 = sphi 0, %s183
      %s198 = sphi 0, %s184
      %s202 = sphi 0, %s202
      %s204 = sphi 0, %s202
      %s205 = sphi 0, %s204
      %s219 = sphi 0, %s205
      %s225 = sphi 0, %s227
      %s228 = sphi 0, %s225
      %s229 = sphi 0, %s228
      %s245 = sphi 0, %s229
    $region4: #{tpu_custom_call.1} parent=1 // loop_header_branch
      %24 = sbr.rel (%p22) target = $region8
    $region5: #{tpu_custom_call.1} parent=1 // loop_body
      %s26 = ssub.s32 %s21, 1
      %s27 = ssub.s32 %s21, 2
      %s28 = sadd.s32 %s21, 1
      %s29 = ssub.s32 %s21, %s28
      %p30 = scmp.eq.s32.totalorder %s29, 0
      %s32 = sadd.s32 %s31, 1
      %s33 = scalar_select %p30, %s31, %s32
      %p36 = pneg %p30
      %p37 = scmp.eq.s32.totalorder %s21, 1
      %p38 = por %p36, %p37
      %p39 = scmp.ne.s32.totalorder %s31, %s34
      %p40 = scmp.eq.s32.totalorder %s21, 0
      %p41 = por %p39, %p40
      %p42 = scmp.ne.s32.totalorder %s31, %s34
      %p43 = scmp.eq.s32.totalorder %s26, 1
      %p44 = por %p42, %p43
      %p45 = scmp.ne.s32.totalorder %s34, %s35
      %p46 = scmp.eq.s32.totalorder %s26, 0
      %p47 = por %p45, %p46
      %p48 = scmp.ne.s32.totalorder %s34, %s35
      %p49 = scmp.eq.s32.totalorder %s27, 1
      %p50 = por %p48, %p49
      %p52 = scmp.ne.s32.totalorder %s35, %s51
      %p53 = scmp.eq.s32.totalorder %s27, 0
      %p54 = por %p52, %p53
      %s56 = sadd.s32 %s55, 1
      %p59 = scmp.eq.s32.totalorder %s21, 1
      %p60 = scmp.ne.s32.totalorder %s55, %s57
      %p61 = scmp.eq.s32.totalorder %s21, 0
      %p62 = por %p60, %p61
      %p63 = scmp.ne.s32.totalorder %s55, %s57
      %p64 = scmp.eq.s32.totalorder %s26, 1
      %p65 = por %p63, %p64
      %p66 = scmp.ne.s32.totalorder %s57, %s58
      %p67 = scmp.eq.s32.totalorder %s26, 0
      %p68 = por %p66, %p67
      %p69 = scmp.ne.s32.totalorder %s57, %s58
      %p70 = scmp.eq.s32.totalorder %s27, 1
      %p71 = por %p69, %p70
      %p73 = scmp.ne.s32.totalorder %s58, %s72
      %p74 = scmp.eq.s32.totalorder %s27, 0
      %p75 = por %p73, %p74
      %s77 = sadd.s32 %s76, 1
      %p80 = scmp.eq.s32.totalorder %s21, 1
      %p81 = scmp.ne.s32.totalorder %s76, %s78
      %p82 = scmp.eq.s32.totalorder %s21, 0
      %p83 = por %p81, %p82
      %p84 = scmp.ne.s32.totalorder %s76, %s78
      %p85 = scmp.eq.s32.totalorder %s26, 1
      %p86 = por %p84, %p85
      %p87 = scmp.ne.s32.totalorder %s78, %s79
      %p88 = scmp.eq.s32.totalorder %s26, 0
      %p89 = por %p87, %p88
      %p90 = scmp.ne.s32.totalorder %s78, %s79
      %p91 = scmp.eq.s32.totalorder %s27, 1
      %p92 = por %p90, %p91
      %p94 = scmp.ne.s32.totalorder %s79, %s93
      %p95 = scmp.eq.s32.totalorder %s27, 0
      %p96 = por %p94, %p95
      %s98 = sadd.s32 %s97, 1
      %p101 = scmp.eq.s32.totalorder %s21, 1
      %p102 = scmp.ne.s32.totalorder %s97, %s99
      %p103 = scmp.eq.s32.totalorder %s21, 0
      %p104 = por %p102, %p103
      %p105 = scmp.ne.s32.totalorder %s97, %s99
      %p106 = scmp.eq.s32.totalorder %s26, 1
      %p107 = por %p105, %p106
      %p108 = scmp.ne.s32.totalorder %s99, %s100
      %p109 = scmp.eq.s32.totalorder %s26, 0
      %p110 = por %p108, %p109
      %p111 = scmp.ne.s32.totalorder %s99, %s100
      %p112 = scmp.eq.s32.totalorder %s27, 1
      %p113 = por %p111, %p112
      %p115 = scmp.ne.s32.totalorder %s100, %s114
      %p116 = scmp.eq.s32.totalorder %s27, 0
      %p117 = por %p115, %p116
      %s119 = sadd.s32 %s118, 1
      %p122 = scmp.eq.s32.totalorder %s21, 1
      %p123 = scmp.ne.s32.totalorder %s118, %s120
      %p124 = scmp.eq.s32.totalorder %s21, 0
      %p125 = por %p123, %p124
      %p126 = scmp.ne.s32.totalorder %s118, %s120
      %p127 = scmp.eq.s32.totalorder %s26, 1
      %p128 = por %p126, %p127
      %p129 = scmp.ne.s32.totalorder %s120, %s121
      %p130 = scmp.eq.s32.totalorder %s26, 0
      %p131 = por %p129, %p130
      %p132 = scmp.ne.s32.totalorder %s120, %s121
      %p133 = scmp.eq.s32.totalorder %s27, 1
      %p134 = por %p132, %p133
      %p136 = scmp.ne.s32.totalorder %s121, %s135
      %p137 = scmp.eq.s32.totalorder %s27, 0
      %p138 = por %p136, %p137
      %s140 = sadd.s32 %s139, 1
      %p143 = scmp.eq.s32.totalorder %s21, 1
      %p144 = scmp.ne.s32.totalorder %s139, %s141
      %p145 = scmp.eq.s32.totalorder %s21, 0
      %p146 = por %p144, %p145
      %p147 = scmp.ne.s32.totalorder %s139, %s141
      %p148 = scmp.eq.s32.totalorder %s26, 1
      %p149 = por %p147, %p148
      %p150 = scmp.ne.s32.totalorder %s141, %s142
      %p151 = scmp.eq.s32.totalorder %s26, 0
      %p152 = por %p150, %p151
      %p153 = scmp.ne.s32.totalorder %s141, %s142
      %p154 = scmp.eq.s32.totalorder %s27, 1
      %p155 = por %p153, %p154
      %p157 = scmp.ne.s32.totalorder %s142, %s156
      %p158 = scmp.eq.s32.totalorder %s27, 0
      %p159 = por %p157, %p158
      %s161 = sadd.s32 %s160, 1
      %p164 = scmp.eq.s32.totalorder %s21, 1
      %p165 = scmp.ne.s32.totalorder %s160, %s162
      %p166 = scmp.eq.s32.totalorder %s21, 0
      %p167 = por %p165, %p166
      %p168 = scmp.ne.s32.totalorder %s160, %s162
      %p169 = scmp.eq.s32.totalorder %s26, 1
      %p170 = por %p168, %p169
      %p171 = scmp.ne.s32.totalorder %s162, %s163
      %p172 = scmp.eq.s32.totalorder %s26, 0
      %p173 = por %p171, %p172
      %p174 = scmp.ne.s32.totalorder %s162, %s163
      %p175 = scmp.eq.s32.totalorder %s27, 1
      %p176 = por %p174, %p175
      %p178 = scmp.ne.s32.totalorder %s163, %s177
      %p179 = scmp.eq.s32.totalorder %s27, 0
      %p180 = por %p178, %p179
      %s182 = sadd.s32 %s181, 1
      %p185 = scmp.eq.s32.totalorder %s21, 1
      %p186 = scmp.ne.s32.totalorder %s181, %s183
      %p187 = scmp.eq.s32.totalorder %s21, 0
      %p188 = por %p186, %p187
      %p189 = scmp.ne.s32.totalorder %s181, %s183
      %p190 = scmp.eq.s32.totalorder %s26, 1
      %p191 = por %p189, %p190
      %p192 = scmp.ne.s32.totalorder %s183, %s184
      %p193 = scmp.eq.s32.totalorder %s26, 0
      %p194 = por %p192, %p193
      %p195 = scmp.ne.s32.totalorder %s183, %s184
      %p196 = scmp.eq.s32.totalorder %s27, 1
      %p197 = por %p195, %p196
      %p199 = scmp.ne.s32.totalorder %s184, %s198
      %p200 = scmp.eq.s32.totalorder %s27, 0
      %p201 = por %p199, %p200
      %s203 = sadd.s32 %s202, 1
      %p206 = scmp.eq.s32.totalorder %s21, 1
      %p207 = scmp.ne.s32.totalorder %s202, %s204
      %p208 = scmp.eq.s32.totalorder %s21, 0
      %p209 = por %p207, %p208
      %p210 = scmp.ne.s32.totalorder %s202, %s204
      %p211 = scmp.eq.s32.totalorder %s26, 1
      %p212 = por %p210, %p211
      %p213 = scmp.ne.s32.totalorder %s204, %s205
      %p214 = scmp.eq.s32.totalorder %s26, 0
      %p215 = por %p213, %p214
      %p216 = scmp.ne.s32.totalorder %s204, %s205
      %p217 = scmp.eq.s32.totalorder %s27, 1
      %p218 = por %p216, %p217
      %p220 = scmp.ne.s32.totalorder %s205, %s219
      %p221 = scmp.eq.s32.totalorder %s27, 0
      %p222 = por %p220, %p221
      %s223 = ssub.s32 %s21, %s28
      %p224 = scmp.eq.s32.totalorder %s223, 0
      %s226 = sadd.s32 %s225, 1
      %s227 = scalar_select %p224, %s225, %s226
      %p230 = pneg %p224
      %p231 = scmp.eq.s32.totalorder %s21, 1
      %p232 = por %p230, %p231
      %p233 = scmp.ne.s32.totalorder %s225, %s228
      %p234 = scmp.eq.s32.totalorder %s21, 0
      %p235 = por %p233, %p234
      %p236 = scmp.ne.s32.totalorder %s225, %s228
      %p237 = scmp.eq.s32.totalorder %s26, 1
      %p238 = por %p236, %p237
      %p239 = scmp.ne.s32.totalorder %s228, %s229
      %p240 = scmp.eq.s32.totalorder %s26, 0
      %p241 = por %p239, %p240
      %p242 = scmp.ne.s32.totalorder %s228, %s229
      %p243 = scmp.eq.s32.totalorder %s27, 1
      %p244 = por %p242, %p243
      %p246 = scmp.ne.s32.totalorder %s229, %s245
      %p247 = scmp.eq.s32.totalorder %s27, 0
      %p248 = por %p246, %p247
      %p249 = scmp.le.s32.totalorder 1, %s21
      %p250 = scmp.lt.s32.totalorder %s21, 3
      %p251 = pnand %p249, %p250
      %p252 = pneg %p251
      // Predicated region
      $region9: #{tpu_custom_call.1} parent=5 // pred_check
        _
      $region10: #{tpu_custom_call.1} parent=5 // pred_check_branch
        %254 = sbr.rel (%p251) target = $region12
      $region11: #{tpu_custom_call.1} parent=5 // pred_region
        %s255 = ssub.s32 %s21, 1
        // Predicated region
        $region13: #{tpu_custom_call.1} parent=11 // pred_check
          %p256 = pneg %p68
        $region14: #{tpu_custom_call.1} parent=11 // pred_check_branch
          %258 = sbr.rel (%p256) target = $region16
        $region15: #{tpu_custom_call.1} parent=11 // pred_region
          _
        $region16: #{tpu_custom_call.1} parent=11 // pred_fallthru
          _
        // Predicated region
        $region17: #{tpu_custom_call.1} parent=11 // pred_check
          %p259 = pneg %p89
        $region18: #{tpu_custom_call.1} parent=11 // pred_check_branch
          %261 = sbr.rel (%p259) target = $region20
        $region19: #{tpu_custom_call.1} parent=11 // pred_region
          _
        $region20: #{tpu_custom_call.1} parent=11 // pred_fallthru
          _
        // Predicated region
        $region21: #{tpu_custom_call.1} parent=11 // pred_check
          %p262 = pneg %p110
        $region22: #{tpu_custom_call.1} parent=11 // pred_check_branch
          %264 = sbr.rel (%p262) target = $region24
        $region23: #{tpu_custom_call.1} parent=11 // pred_region
          _
        $region24: #{tpu_custom_call.1} parent=11 // pred_fallthru
          _
        // Predicated region
        $region25: #{tpu_custom_call.1} parent=11 // pred_check
          %p265 = pneg %p131
        $region26: #{tpu_custom_call.1} parent=11 // pred_check_branch
          %267 = sbr.rel (%p265) target = $region28
        $region27: #{tpu_custom_call.1} parent=11 // pred_region
          _
        $region28: #{tpu_custom_call.1} parent=11 // pred_fallthru
          _
        // Predicated region
        $region29: #{tpu_custom_call.1} parent=11 // pred_check
          %p268 = pneg %p152
        $region30: #{tpu_custom_call.1} parent=11 // pred_check_branch
          %270 = sbr.rel (%p268) target = $region32
        $region31: #{tpu_custom_call.1} parent=11 // pred_region
          _
        $region32: #{tpu_custom_call.1} parent=11 // pred_fallthru
          _
        // Predicated region
        $region33: #{tpu_custom_call.1} parent=11 // pred_check
          %p271 = pneg %p173
        $region34: #{tpu_custom_call.1} parent=11 // pred_check_branch
          %273 = sbr.rel (%p271) target = $region36
        $region35: #{tpu_custom_call.1} parent=11 // pred_region
          _
        $region36: #{tpu_custom_call.1} parent=11 // pred_fallthru
          _
        // Predicated region
        $region37: #{tpu_custom_call.1} parent=11 // pred_check
          %p274 = pneg %p194
        $region38: #{tpu_custom_call.1} parent=11 // pred_check_branch
          %276 = sbr.rel (%p274) target = $region40
        $region39: #{tpu_custom_call.1} parent=11 // pred_region
          _
        $region40: #{tpu_custom_call.1} parent=11 // pred_fallthru
          _
        // Predicated region
        $region41: #{tpu_custom_call.1} parent=11 // pred_check
          %p277 = pneg %p215
        $region42: #{tpu_custom_call.1} parent=11 // pred_check_branch
          %279 = sbr.rel (%p277) target = $region44
        $region43: #{tpu_custom_call.1} parent=11 // pred_region
          _
        $region44: #{tpu_custom_call.1} parent=11 // pred_fallthru
          _
      $region12: #{tpu_custom_call.1} parent=5 // pred_fallthru
        _
      %p280 = scmp.lt.s32.totalorder %s21, 2
      // Predicated region
      $region45: #{tpu_custom_call.1} parent=5 // pred_check
        %p281 = pneg %p280
      $region46: #{tpu_custom_call.1} parent=5 // pred_check_branch
        %283 = sbr.rel (%p281) target = $region48
      $region47: #{tpu_custom_call.1} parent=5 // pred_region
        // Predicated region
        $region49: #{tpu_custom_call.1} parent=47 // pred_check
          %p284 = pneg %p41
        $region50: #{tpu_custom_call.1} parent=47 // pred_check_branch
          %286 = sbr.rel (%p284) target = $region52
        $region51: #{tpu_custom_call.1} parent=47 // pred_region
          %s287 = sand.u32 %s31, 1
          %s288 = scalar_lea.sflag [#allocation3], %s287
          %s289 = sand.u32 %s31, 1
          %s290 = smul.addr %s289, 8
          %s291 = scalar_lea.vmem [#allocation2], %s290
          %293 = vsyncadd %s288, 0
          %s294 = smul.addr %s21, 8
          %s295 = scalar_lea.hbm %s0, %s294
          %s297 = sshll.u32 %s295, 4
          %s298 = int_to_ptr.hbm [resolvable:$true] %s297
          %s299 = sshll.u32 %s291, 4
          %s300 = int_to_ptr.vmem [resolvable:$true] %s299
          %302 = dma.hbm_to_vmem [thread:$0]  %s298, 128, %s300, %s288
        $region52: #{tpu_custom_call.1} parent=47 // pred_fallthru
          _
      $region48: #{tpu_custom_call.1} parent=5 // pred_fallthru
        _
      %p303 = scmp.le.s32.totalorder 1, %s21
      %p304 = scmp.lt.s32.totalorder %s21, 3
      %p305 = pnand %p303, %p304
      %p306 = pneg %p305
      // Predicated region
      $region53: #{tpu_custom_call.1} parent=5 // pred_check
        _
      $region54: #{tpu_custom_call.1} parent=5 // pred_check_branch
        %308 = sbr.rel (%p305) target = $region56
      $region55: #{tpu_custom_call.1} parent=5 // pred_region
        %s309 = ssub.s32 %s21, 1
        %s310 = sand.u32 %s34, 1
        %s311 = scalar_lea.sflag [#allocation3], %s310
        %s312 = sand.u32 %s34, 1
        %s313 = smul.addr %s312, 8
        %s314 = scalar_lea.vmem [#allocation2], %s313
        // Predicated region
        $region57: #{tpu_custom_call.1} parent=55 // pred_check
          %p315 = pneg %p47
        $region58: #{tpu_custom_call.1} parent=55 // pred_check_branch
          %317 = sbr.rel (%p315) target = $region60
        $region59: #{tpu_custom_call.1} parent=55 // pred_region
          %319 = dma.done %s311, 128
        $region60: #{tpu_custom_call.1} parent=55 // pred_fallthru
          _
        %s320 = sand.u32 %s34, 1
        %s321 = scalar_lea.sflag [#allocation3], %s320
        %s322 = sand.u32 %s34, 1
        %s323 = smul.addr %s322, 8
        %s324 = scalar_lea.vmem [#allocation2], %s323
        %p325 = pneg %p47
        %p326 = pneg %p44
        %p327 = pneg %p68
        %p328 = pneg %p65
        %p329 = pneg %p89
        %p330 = pneg %p86
        %p331 = pneg %p110
        %p332 = pneg %p107
        %p333 = pneg %p131
        %p334 = pneg %p128
        %p335 = pneg %p152
        %p336 = pneg %p149
        %p337 = pneg %p173
        %p338 = pneg %p170
        %p339 = pneg %p194
        %p340 = pneg %p191
        %p341 = pneg %p215
        %p342 = pneg %p212
        %p343 = pneg %p241
        %p344 = pneg %p238
        %s345 = sand.u32 %s228, 1
        %s346 = scalar_lea.sflag [#allocation4], %s345
        %s347 = sand.u32 %s228, 1
        %s348 = smul.addr %s347, 8
        %s349 = scalar_lea.vmem [#allocation5], %s348
        %v350 = vld [vmem:[%s314] sm:$0xff]
        %v351 = vld [vmem:[%s1] sm:$0xff]
        %v352 = vld [vmem:[%s1 + $0x8] sm:$0xff]
        %v353 = vld [vmem:[%s1 + $0x10] sm:$0xff]
        %v354 = vld [vmem:[%s1 + $0x18] sm:$0xff]
        %v355 = vld [vmem:[%s2] sm:$0x1]
        %v357 = vperm.slane %v355, 0
        %vm359 = vcmask 261120
        %v361 = vsel %vm359, %v350, 0
        %363 = vmatpush.msra.mxu0 0.0
        %364 = vmatpush.msra.mxu0 0.0
        %365 = vmatpush.msra.mxu0 0.0
        %366 = vmatpush.msra.mxu0 0.0
        %367 = vmatpush.msra.mxu0 0.0
        %368 = vmatpush.msra.mxu0 0.0
        %369 = vmatpush.msra.mxu0 0.0
        %370 = vmatpush.msra.mxu0 0.0
        %371 = vmatpush.msra.mxu0 0.0
        %372 = vmatpush.msra.mxu0 0.0
        %373 = vmatpush.msra.mxu0 0.0
        %374 = vmatpush.msra.mxu0 0.0
        %375 = vmatpush.msra.mxu0 %v354
        %376 = vmatpush.msra.mxu0 %v353
        %377 = vmatpush.msra.mxu0 %v352
        %378 = vmatpush.msra.mxu0 %v351
        %379 = vmatmul.f32.gmra.mxu0 %v361
        %v380 = vpop.f32.mrf.mxu0
        %v381 = vadd.f32 %v357, %v380
        %382 = vdwg.mxu0
        %384 = vrot.lane.b32.xlu0 %v381, 120
        %v385 = vpop.permute.xlu0 %384
        %387 = vrot.lane.b32.xlu0 %v381, 112
        %v388 = vpop.permute.xlu0 %387
        %390 = vrot.lane.b32.xlu0 %v381, 104
        %v391 = vpop.permute.xlu0 %390
        %v393 = vrot.slane %v388, 4
        %vm394 = vcmask 1047556
        %v395 = vsel %vm394, %v393, %v381
        %v396 = vrot.slane %v381, 4
        %v397 = vsel %vm394, %v388, %v396
        %v399 = vunpack.c.l.s4 1983009808
        %v400 = vunpack.c.0.s8 %v399
        %v401 = vperm.slane %v395, %v400
        %v403 = vunpack.c.l.s4 1983009808
        %v404 = vunpack.c.0.s8 %v403
        %v405 = vperm.slane %v397, %v404
        %v406 = vrot.slane %v391, 4
        %v407 = vsel %vm394, %v406, %v385
        %v408 = vrot.slane %v385, 4
        %v409 = vsel %vm394, %v391, %v408
        %v411 = vunpack.c.l.s4 1983009808
        %v412 = vunpack.c.0.s8 %v411
        %v413 = vperm.slane %v407, %v412
        %v415 = vunpack.c.l.s4 1983009808
        %v416 = vunpack.c.0.s8 %v415
        %v417 = vperm.slane %v409, %v416
        %v418 = vrot.slane %v413, 4
        %v419 = vsel %vm394, %v418, %v401
        %v420 = vrot.slane %v401, 4
        %v421 = vsel %vm394, %v413, %v420
        %v423 = vunpack.c.l.s4 1934713408
        %v424 = vunpack.c.0.s8 %v423
        %v425 = vperm.slane %v419, %v424
        %v427 = vunpack.c.l.s4 1934713408
        %v428 = vunpack.c.0.s8 %v427
        %v429 = vperm.slane %v421, %v428
        %v430 = vrot.slane %v417, 4
        %v431 = vsel %vm394, %v430, %v405
        %v432 = vrot.slane %v405, 4
        %v433 = vsel %vm394, %v417, %v432
        %v435 = vunpack.c.l.s4 1934713408
        %v436 = vunpack.c.0.s8 %v435
        %v437 = vperm.slane %v431, %v436
        %v439 = vunpack.c.l.s4 1934713408
        %v440 = vunpack.c.0.s8 %v439
        %v441 = vperm.slane %v433, %v440
        %v442 = vrot.slane %v425, 4
        %v443 = vsel %vm394, 0.0, %v442
        %v444 = vrot.slane %v429, 4
        %v445 = vsel %vm394, 0.0, %v444
        %v446 = vrot.slane %v437, 4
        %v447 = vsel %vm394, 0.0, %v446
        %v448 = vrot.slane %v441, 4
        %v449 = vsel %vm394, 0.0, %v448
        %v450 = vsel %vm394, %v444, %v425
        %v452 = vunpack.c.l.s4 1983009808
        %v453 = vunpack.c.0.s8 %v452
        %v454 = vperm.slane %v450, %v453
        %v455 = vrot.slane %v445, 4
        %v456 = vsel %vm394, %v455, %v443
        %v458 = vunpack.c.l.s4 1983009808
        %v459 = vunpack.c.0.s8 %v458
        %v460 = vperm.slane %v456, %v459
        %v461 = vsel %vm394, %v448, %v437
        %v463 = vunpack.c.l.s4 1983009808
        %v464 = vunpack.c.0.s8 %v463
        %v465 = vperm.slane %v461, %v464
        %v466 = vrot.slane %v449, 4
        %v467 = vsel %vm394, %v466, %v447
        %v469 = vunpack.c.l.s4 1983009808
        %v470 = vunpack.c.0.s8 %v469
        %v471 = vperm.slane %v467, %v470
        %v472 = vrot.slane %v460, 4
        %v473 = vsel %vm394, %v472, %v454
        %v474 = vrot.slane %v454, 4
        %v475 = vsel %vm394, %v460, %v474
        %v477 = vunpack.c.l.s4 1934713408
        %v478 = vunpack.c.0.s8 %v477
        %v479 = vperm.slane %v473, %v478
        %v481 = vunpack.c.l.s4 1934713408
        %v482 = vunpack.c.0.s8 %v481
        %v483 = vperm.slane %v475, %v482
        %v484 = vrot.slane %v471, 4
        %v485 = vsel %vm394, %v484, %v465
        %v486 = vrot.slane %v465, 4
        %v487 = vsel %vm394, %v471, %v486
        %v489 = vunpack.c.l.s4 1934713408
        %v490 = vunpack.c.0.s8 %v489
        %v491 = vperm.slane %v485, %v490
        %v493 = vunpack.c.l.s4 1934713408
        %v494 = vunpack.c.0.s8 %v493
        %v495 = vperm.slane %v487, %v494
        %v496 = vrot.slane %v491, 4
        %v497 = vsel %vm394, %v496, %v479
        %v498 = vrot.slane %v479, 4
        %v499 = vsel %vm394, %v491, %v498
        %v500 = vrot.slane %v495, 4
        %v501 = vsel %vm394, %v500, %v483
        %v502 = vrot.slane %v483, 4
        %v503 = vsel %vm394, %v495, %v502
        %504 = vrot.lane.b32.xlu0 %v381, 96
        %v505 = vpop.permute.xlu0 %504
        %506 = vrot.lane.b32.xlu0 %v385, 96
        %v507 = vpop.permute.xlu0 %506
        %508 = vrot.lane.b32.xlu0 %v388, 96
        %v509 = vpop.permute.xlu0 %508
        %510 = vrot.lane.b32.xlu0 %v391, 96
        %v511 = vpop.permute.xlu0 %510
        %v516 = vrot.slane %v509, 4
        %v517 = vsel %vm394, %v516, %v505
        %v518 = vrot.slane %v505, 4
        %v519 = vsel %vm394, %v509, %v518
        %v521 = vunpack.c.l.s4 1983009808
        %v522 = vunpack.c.0.s8 %v521
        %v523 = vperm.slane %v517, %v522
        %v525 = vunpack.c.l.s4 1983009808
        %v526 = vunpack.c.0.s8 %v525
        %v527 = vperm.slane %v519, %v526
        %v528 = vrot.slane %v511, 4
        %v529 = vsel %vm394, %v528, %v507
        %v530 = vrot.slane %v507, 4
        %v531 = vsel %vm394, %v511, %v530
        %v533 = vunpack.c.l.s4 1983009808
        %v534 = vunpack.c.0.s8 %v533
        %v535 = vperm.slane %v529, %v534
        %v537 = vunpack.c.l.s4 1983009808
        %v538 = vunpack.c.0.s8 %v537
        %v539 = vperm.slane %v531, %v538
        %v540 = vrot.slane %v535, 4
        %v541 = vsel %vm394, %v540, %v523
        %v542 = vrot.slane %v523, 4
        %v543 = vsel %vm394, %v535, %v542
        %v545 = vunpack.c.l.s4 1934713408
        %v546 = vunpack.c.0.s8 %v545
        %v547 = vperm.slane %v541, %v546
        %v549 = vunpack.c.l.s4 1934713408
        %v550 = vunpack.c.0.s8 %v549
        %v551 = vperm.slane %v543, %v550
        %v552 = vrot.slane %v539, 4
        %v553 = vsel %vm394, %v552, %v527
        %v554 = vrot.slane %v527, 4
        %v555 = vsel %vm394, %v539, %v554
        %v557 = vunpack.c.l.s4 1934713408
        %v558 = vunpack.c.0.s8 %v557
        %v559 = vperm.slane %v553, %v558
        %v561 = vunpack.c.l.s4 1934713408
        %v562 = vunpack.c.0.s8 %v561
        %v563 = vperm.slane %v555, %v562
        %v564 = vrot.slane %v547, 4
        %v565 = vsel %vm394, 0.0, %v564
        %v566 = vrot.slane %v551, 4
        %v567 = vsel %vm394, 0.0, %v566
        %v568 = vrot.slane %v559, 4
        %v569 = vsel %vm394, 0.0, %v568
        %v570 = vrot.slane %v563, 4
        %v571 = vsel %vm394, 0.0, %v570
        %v572 = vsel %vm394, %v566, %v547
        %v574 = vunpack.c.l.s4 1983009808
        %v575 = vunpack.c.0.s8 %v574
        %v576 = vperm.slane %v572, %v575
        %v577 = vrot.slane %v567, 4
        %v578 = vsel %vm394, %v577, %v565
        %v580 = vunpack.c.l.s4 1983009808
        %v581 = vunpack.c.0.s8 %v580
        %v582 = vperm.slane %v578, %v581
        %v583 = vsel %vm394, %v570, %v559
        %v585 = vunpack.c.l.s4 1983009808
        %v586 = vunpack.c.0.s8 %v585
        %v587 = vperm.slane %v583, %v586
        %v588 = vrot.slane %v571, 4
        %v589 = vsel %vm394, %v588, %v569
        %v591 = vunpack.c.l.s4 1983009808
        %v592 = vunpack.c.0.s8 %v591
        %v593 = vperm.slane %v589, %v592
        %v594 = vrot.slane %v582, 4
        %v595 = vsel %vm394, %v594, %v576
        %v596 = vrot.slane %v576, 4
        %v597 = vsel %vm394, %v582, %v596
        %v599 = vunpack.c.l.s4 1934713408
        %v600 = vunpack.c.0.s8 %v599
        %v601 = vperm.slane %v595, %v600
        %v603 = vunpack.c.l.s4 1934713408
        %v604 = vunpack.c.0.s8 %v603
        %v605 = vperm.slane %v597, %v604
        %v606 = vrot.slane %v593, 4
        %v607 = vsel %vm394, %v606, %v587
        %v608 = vrot.slane %v587, 4
        %v609 = vsel %vm394, %v593, %v608
        %v611 = vunpack.c.l.s4 1934713408
        %v612 = vunpack.c.0.s8 %v611
        %v613 = vperm.slane %v607, %v612
        %v615 = vunpack.c.l.s4 1934713408
        %v616 = vunpack.c.0.s8 %v615
        %v617 = vperm.slane %v609, %v616
        %v618 = vrot.slane %v613, 4
        %v619 = vsel %vm394, %v618, %v601
        %v620 = vrot.slane %v601, 4
        %v621 = vsel %vm394, %v613, %v620
        %v622 = vrot.slane %v617, 4
        %v623 = vsel %vm394, %v622, %v605
        %v624 = vrot.slane %v605, 4
        %v625 = vsel %vm394, %v617, %v624
        %626 = vrot.lane.b32.xlu0 %v381, 64
        %v627 = vpop.permute.xlu0 %626
        %628 = vrot.lane.b32.xlu0 %v385, 64
        %v629 = vpop.permute.xlu0 %628
        %630 = vrot.lane.b32.xlu0 %v388, 64
        %v631 = vpop.permute.xlu0 %630
        %632 = vrot.lane.b32.xlu0 %v391, 64
        %v633 = vpop.permute.xlu0 %632
        %v638 = vrot.slane %v631, 4
        %v639 = vsel %vm394, %v638, %v627
        %v640 = vrot.slane %v627, 4
        %v641 = vsel %vm394, %v631, %v640
        %v643 = vunpack.c.l.s4 1983009808
        %v644 = vunpack.c.0.s8 %v643
        %v645 = vperm.slane %v639, %v644
        %v647 = vunpack.c.l.s4 1983009808
        %v648 = vunpack.c.0.s8 %v647
        %v649 = vperm.slane %v641, %v648
        %v650 = vrot.slane %v633, 4
        %v651 = vsel %vm394, %v650, %v629
        %v652 = vrot.slane %v629, 4
        %v653 = vsel %vm394, %v633, %v652
        %v655 = vunpack.c.l.s4 1983009808
        %v656 = vunpack.c.0.s8 %v655
        %v657 = vperm.slane %v651, %v656
        %v659 = vunpack.c.l.s4 1983009808
        %v660 = vunpack.c.0.s8 %v659
        %v661 = vperm.slane %v653, %v660
        %v662 = vrot.slane %v657, 4
        %v663 = vsel %vm394, %v662, %v645
        %v664 = vrot.slane %v645, 4
        %v665 = vsel %vm394, %v657, %v664
        %v667 = vunpack.c.l.s4 1934713408
        %v668 = vunpack.c.0.s8 %v667
        %v669 = vperm.slane %v663, %v668
        %v671 = vunpack.c.l.s4 1934713408
        %v672 = vunpack.c.0.s8 %v671
        %v673 = vperm.slane %v665, %v672
        %v674 = vrot.slane %v661, 4
        %v675 = vsel %vm394, %v674, %v649
        %v676 = vrot.slane %v649, 4
        %v677 = vsel %vm394, %v661, %v676
        %v679 = vunpack.c.l.s4 1934713408
        %v680 = vunpack.c.0.s8 %v679
        %v681 = vperm.slane %v675, %v680
        %v683 = vunpack.c.l.s4 1934713408
        %v684 = vunpack.c.0.s8 %v683
        %v685 = vperm.slane %v677, %v684
        %v686 = vrot.slane %v669, 4
        %v687 = vsel %vm394, 0.0, %v686
        %v688 = vrot.slane %v673, 4
        %v689 = vsel %vm394, 0.0, %v688
        %v690 = vrot.slane %v681, 4
        %v691 = vsel %vm394, 0.0, %v690
        %v692 = vrot.slane %v685, 4
        %v693 = vsel %vm394, 0.0, %v692
        %v694 = vsel %vm394, %v688, %v669
        %v696 = vunpack.c.l.s4 1983009808
        %v697 = vunpack.c.0.s8 %v696
        %v698 = vperm.slane %v694, %v697
        %v699 = vrot.slane %v689, 4
        %v700 = vsel %vm394, %v699, %v687
        %v702 = vunpack.c.l.s4 1983009808
        %v703 = vunpack.c.0.s8 %v702
        %v704 = vperm.slane %v700, %v703
        %v705 = vsel %vm394, %v692, %v681
        %v707 = vunpack.c.l.s4 1983009808
        %v708 = vunpack.c.0.s8 %v707
        %v709 = vperm.slane %v705, %v708
        %v710 = vrot.slane %v693, 4
        %v711 = vsel %vm394, %v710, %v691
        %v713 = vunpack.c.l.s4 1983009808
        %v714 = vunpack.c.0.s8 %v713
        %v715 = vperm.slane %v711, %v714
        %v716 = vrot.slane %v704, 4
        %v717 = vsel %vm394, %v716, %v698
        %v718 = vrot.slane %v698, 4
        %v719 = vsel %vm394, %v704, %v718
        %v721 = vunpack.c.l.s4 1934713408
        %v722 = vunpack.c.0.s8 %v721
        %v723 = vperm.slane %v717, %v722
        %v725 = vunpack.c.l.s4 1934713408
        %v726 = vunpack.c.0.s8 %v725
        %v727 = vperm.slane %v719, %v726
        %v728 = vrot.slane %v715, 4
        %v729 = vsel %vm394, %v728, %v709
        %v730 = vrot.slane %v709, 4
        %v731 = vsel %vm394, %v715, %v730
        %v733 = vunpack.c.l.s4 1934713408
        %v734 = vunpack.c.0.s8 %v733
        %v735 = vperm.slane %v729, %v734
        %v737 = vunpack.c.l.s4 1934713408
        %v738 = vunpack.c.0.s8 %v737
        %v739 = vperm.slane %v731, %v738
        %v740 = vrot.slane %v735, 4
        %v741 = vsel %vm394, %v740, %v723
        %v742 = vrot.slane %v723, 4
        %v743 = vsel %vm394, %v735, %v742
        %v744 = vrot.slane %v739, 4
        %v745 = vsel %vm394, %v744, %v727
        %v746 = vrot.slane %v727, 4
        %v747 = vsel %vm394, %v739, %v746
        %vm748 = vcmask 64512
        %v750 = vsel %vm748, %v497, 0
        %v753 = vsel %vm748, %v619, 0
        %755 = vmatpush.xpose.msra.mxu0 0.0
        %756 = vmatpush.xpose.msra.mxu0 0.0
        %757 = vmatpush.xpose.msra.mxu0 0.0
        %758 = vmatpush.xpose.msra.mxu0 0.0
        %759 = vmatpush.xpose.msra.mxu0 0.0
        %760 = vmatpush.xpose.msra.mxu0 0.0
        %761 = vmatpush.xpose.msra.mxu0 0.0
        %762 = vmatpush.xpose.msra.mxu0 0.0
        %763 = vmatpush.xpose.msra.mxu0 0.0
        %764 = vmatpush.xpose.msra.mxu0 0.0
        %765 = vmatpush.xpose.msra.mxu0 0.0
        %766 = vmatpush.xpose.msra.mxu0 0.0
        %767 = vmatpush.xpose.msra.mxu0 0.0
        %768 = vmatpush.xpose.msra.mxu0 0.0
        %769 = vmatpush.xpose.msra.mxu0 0.0
        %770 = vmatpush.xpose.msra.mxu0 %v753
        %771 = vmatmul.f32.gmra.mxu0 %v750
        %v772 = vpop.f32.mrf.mxu0
        %v773 = vadd.f32 0.0, %v772
        %774 = vdwg.mxu0
        %v776 = vsel %vm748, %v499, 0
        %v779 = vsel %vm748, %v621, 0
        %781 = vmatpush.xpose.msra.mxu0 0.0
        %782 = vmatpush.xpose.msra.mxu0 0.0
        %783 = vmatpush.xpose.msra.mxu0 0.0
        %784 = vmatpush.xpose.msra.mxu0 0.0
        %785 = vmatpush.xpose.msra.mxu0 0.0
        %786 = vmatpush.xpose.msra.mxu0 0.0
        %787 = vmatpush.xpose.msra.mxu0 0.0
        %788 = vmatpush.xpose.msra.mxu0 0.0
        %789 = vmatpush.xpose.msra.mxu0 0.0
        %790 = vmatpush.xpose.msra.mxu0 0.0
        %791 = vmatpush.xpose.msra.mxu0 0.0
        %792 = vmatpush.xpose.msra.mxu0 0.0
        %793 = vmatpush.xpose.msra.mxu0 0.0
        %794 = vmatpush.xpose.msra.mxu0 0.0
        %795 = vmatpush.xpose.msra.mxu0 0.0
        %796 = vmatpush.xpose.msra.mxu0 %v779
        %797 = vmatmul.f32.gmra.mxu0 %v776
        %v798 = vpop.f32.mrf.mxu0
        %v799 = vadd.f32 0.0, %v798
        %800 = vdwg.mxu0
        %v802 = vsel %vm748, %v501, 0
        %v805 = vsel %vm748, %v623, 0
        %807 = vmatpush.xpose.msra.mxu0 0.0
        %808 = vmatpush.xpose.msra.mxu0 0.0
        %809 = vmatpush.xpose.msra.mxu0 0.0
        %810 = vmatpush.xpose.msra.mxu0 0.0
        %811 = vmatpush.xpose.msra.mxu0 0.0
        %812 = vmatpush.xpose.msra.mxu0 0.0
        %813 = vmatpush.xpose.msra.mxu0 0.0
        %814 = vmatpush.xpose.msra.mxu0 0.0
        %815 = vmatpush.xpose.msra.mxu0 0.0
        %816 = vmatpush.xpose.msra.mxu0 0.0
        %817 = vmatpush.xpose.msra.mxu0 0.0
        %818 = vmatpush.xpose.msra.mxu0 0.0
        %819 = vmatpush.xpose.msra.mxu0 0.0
        %820 = vmatpush.xpose.msra.mxu0 0.0
        %821 = vmatpush.xpose.msra.mxu0 0.0
        %822 = vmatpush.xpose.msra.mxu0 %v805
        %823 = vmatmul.f32.gmra.mxu0 %v802
        %v824 = vpop.f32.mrf.mxu0
        %v825 = vadd.f32 0.0, %v824
        %826 = vdwg.mxu0
        %v828 = vsel %vm748, %v503, 0
        %v831 = vsel %vm748, %v625, 0
        %833 = vmatpush.xpose.msra.mxu0 0.0
        %834 = vmatpush.xpose.msra.mxu0 0.0
        %835 = vmatpush.xpose.msra.mxu0 0.0
        %836 = vmatpush.xpose.msra.mxu0 0.0
        %837 = vmatpush.xpose.msra.mxu0 0.0
        %838 = vmatpush.xpose.msra.mxu0 0.0
        %839 = vmatpush.xpose.msra.mxu0 0.0
        %840 = vmatpush.xpose.msra.mxu0 0.0
        %841 = vmatpush.xpose.msra.mxu0 0.0
        %842 = vmatpush.xpose.msra.mxu0 0.0
        %843 = vmatpush.xpose.msra.mxu0 0.0
        %844 = vmatpush.xpose.msra.mxu0 0.0
        %845 = vmatpush.xpose.msra.mxu0 0.0
        %846 = vmatpush.xpose.msra.mxu0 0.0
        %847 = vmatpush.xpose.msra.mxu0 0.0
        %848 = vmatpush.xpose.msra.mxu0 %v831
        %849 = vmatmul.f32.gmra.mxu0 %v828
        %v850 = vpop.f32.mrf.mxu0
        %v851 = vadd.f32 0.0, %v850
        %852 = vdwg.mxu0
        %v853 = vsel %vm748, %v773, -inf
        %854 = vmax.xlane.f32.xlu0 %v853
        %v855 = vpop.xlane.xlu0 %854
        %v856 = vsel %vm748, %v799, -inf
        %857 = vmax.xlane.f32.xlu0 %v856
        %v858 = vpop.xlane.xlu0 %857
        %v859 = vsel %vm748, %v825, -inf
        %860 = vmax.xlane.f32.xlu0 %v859
        %v861 = vpop.xlane.xlu0 %860
        %v862 = vsel %vm748, %v851, -inf
        %863 = vmax.xlane.f32.xlu0 %v862
        %v864 = vpop.xlane.xlu0 %863
        %v865 = vsub.f32 %v773, %v855
        %v866 = vsub.f32 %v799, %v858
        %v867 = vsub.f32 %v825, %v861
        %v868 = vsub.f32 %v851, %v864
        %v869 = vmul.f32 %v865, 1.442695
        %v870 = vpow.pop %v869
        %v871 = vmul.f32 %v866, 1.442695
        %v872 = vpow.pop %v871
        %v873 = vmul.f32 %v867, 1.442695
        %v874 = vpow.pop %v873
        %v875 = vmul.f32 %v868, 1.442695
        %v876 = vpow.pop %v875
        %v877 = vsel %vm748, %v870, 0.0
        %878 = vadd.xlane.f32.xlu0 %v877
        %v879 = vpop.xlane.xlu0 %878
        %v880 = vsel %vm748, %v872, 0.0
        %881 = vadd.xlane.f32.xlu0 %v880
        %v882 = vpop.xlane.xlu0 %881
        %v883 = vsel %vm748, %v874, 0.0
        %884 = vadd.xlane.f32.xlu0 %v883
        %v885 = vpop.xlane.xlu0 %884
        %v886 = vsel %vm748, %v876, 0.0
        %887 = vadd.xlane.f32.xlu0 %v886
        %v888 = vpop.xlane.xlu0 %887
        %v889 = vrcp.pop %v879
        %v890 = vmul.f32 %v879, %v889
        %v891 = vsub.f32 1.0, %v890
        %v892 = vmul.f32 %v889, %v891
        %v893 = vadd.f32 %v889, %v892
        %vm894 = vweird.f32 %v879
        %vm895 = vweird.f32 %v889
        %vm896 = vmor %vm894, %vm895
        %v897 = vsel %vm896, %v889, %v893
        %v898 = vand.u32 2147483647, %v879
        %vm899 = vcmp.eq.f32.partialorder %v898, 8.507059e+37
        %v900 = vand.u32 %v879, 2147483648
        %v901 = vor.u32 1.1754944e-38, %v900
        %v902 = vsel %vm899, %v901, %v897
        %v903 = vrcp.pop %v882
        %v904 = vmul.f32 %v882, %v903
        %v905 = vsub.f32 1.0, %v904
        %v906 = vmul.f32 %v903, %v905
        %v907 = vadd.f32 %v903, %v906
        %vm908 = vweird.f32 %v882
        %vm909 = vweird.f32 %v903
        %vm910 = vmor %vm908, %vm909
        %v911 = vsel %vm910, %v903, %v907
        %v912 = vand.u32 2147483647, %v882
        %vm913 = vcmp.eq.f32.partialorder %v912, 8.507059e+37
        %v914 = vand.u32 %v882, 2147483648
        %v915 = vor.u32 1.1754944e-38, %v914
        %v916 = vsel %vm913, %v915, %v911
        %v917 = vrcp.pop %v885
        %v918 = vmul.f32 %v885, %v917
        %v919 = vsub.f32 1.0, %v918
        %v920 = vmul.f32 %v917, %v919
        %v921 = vadd.f32 %v917, %v920
        %vm922 = vweird.f32 %v885
        %vm923 = vweird.f32 %v917
        %vm924 = vmor %vm922, %vm923
        %v925 = vsel %vm924, %v917, %v921
        %v926 = vand.u32 2147483647, %v885
        %vm927 = vcmp.eq.f32.partialorder %v926, 8.507059e+37
        %v928 = vand.u32 %v885, 2147483648
        %v929 = vor.u32 1.1754944e-38, %v928
        %v930 = vsel %vm927, %v929, %v925
        %v931 = vrcp.pop %v888
        %v932 = vmul.f32 %v888, %v931
        %v933 = vsub.f32 1.0, %v932
        %v934 = vmul.f32 %v931, %v933
        %v935 = vadd.f32 %v931, %v934
        %vm936 = vweird.f32 %v888
        %vm937 = vweird.f32 %v931
        %vm938 = vmor %vm936, %vm937
        %v939 = vsel %vm938, %v931, %v935
        %v940 = vand.u32 2147483647, %v888
        %vm941 = vcmp.eq.f32.partialorder %v940, 8.507059e+37
        %v942 = vand.u32 %v888, 2147483648
        %v943 = vor.u32 1.1754944e-38, %v942
        %v944 = vsel %vm941, %v943, %v939
        %v945 = vmul.f32 %v870, %v902
        %v946 = vmul.f32 %v872, %v916
        %v947 = vmul.f32 %v874, %v930
        %v948 = vmul.f32 %v876, %v944
        %v950 = vsel %vm748, %v945, 0
        %952 = vmatpush.msra.mxu0 0.0
        %953 = vmatpush.msra.mxu0 0.0
        %954 = vmatpush.msra.mxu0 0.0
        %955 = vmatpush.msra.mxu0 0.0
        %956 = vmatpush.msra.mxu0 0.0
        %957 = vmatpush.msra.mxu0 0.0
        %958 = vmatpush.msra.mxu0 0.0
        %959 = vmatpush.msra.mxu0 0.0
        %960 = vmatpush.msra.mxu0 0.0
        %961 = vmatpush.msra.mxu0 0.0
        %962 = vmatpush.msra.mxu0 0.0
        %963 = vmatpush.msra.mxu0 0.0
        %964 = vmatpush.msra.mxu0 0.0
        %965 = vmatpush.msra.mxu0 0.0
        %966 = vmatpush.msra.mxu0 0.0
        %967 = vmatpush.msra.mxu0 %v741
        %968 = vmatmul.f32.gmra.mxu0 %v950
        %v969 = vpop.f32.mrf.mxu0
        %v970 = vadd.f32 0.0, %v969
        %971 = vdwg.mxu0
        %v973 = vsel %vm748, %v946, 0
        %975 = vmatpush.msra.mxu0 0.0
        %976 = vmatpush.msra.mxu0 0.0
        %977 = vmatpush.msra.mxu0 0.0
        %978 = vmatpush.msra.mxu0 0.0
        %979 = vmatpush.msra.mxu0 0.0
        %980 = vmatpush.msra.mxu0 0.0
        %981 = vmatpush.msra.mxu0 0.0
        %982 = vmatpush.msra.mxu0 0.0
        %983 = vmatpush.msra.mxu0 0.0
        %984 = vmatpush.msra.mxu0 0.0
        %985 = vmatpush.msra.mxu0 0.0
        %986 = vmatpush.msra.mxu0 0.0
        %987 = vmatpush.msra.mxu0 0.0
        %988 = vmatpush.msra.mxu0 0.0
        %989 = vmatpush.msra.mxu0 0.0
        %990 = vmatpush.msra.mxu0 %v743
        %991 = vmatmul.f32.gmra.mxu0 %v973
        %v992 = vpop.f32.mrf.mxu0
        %v993 = vadd.f32 0.0, %v992
        %994 = vdwg.mxu0
        %v996 = vsel %vm748, %v947, 0
        %998 = vmatpush.msra.mxu0 0.0
        %999 = vmatpush.msra.mxu0 0.0
        %1000 = vmatpush.msra.mxu0 0.0
        %1001 = vmatpush.msra.mxu0 0.0
        %1002 = vmatpush.msra.mxu0 0.0
        %1003 = vmatpush.msra.mxu0 0.0
        %1004 = vmatpush.msra.mxu0 0.0
        %1005 = vmatpush.msra.mxu0 0.0
        %1006 = vmatpush.msra.mxu0 0.0
        %1007 = vmatpush.msra.mxu0 0.0
        %1008 = vmatpush.msra.mxu0 0.0
        %1009 = vmatpush.msra.mxu0 0.0
        %1010 = vmatpush.msra.mxu0 0.0
        %1011 = vmatpush.msra.mxu0 0.0
        %1012 = vmatpush.msra.mxu0 0.0
        %1013 = vmatpush.msra.mxu0 %v745
        %1014 = vmatmul.f32.gmra.mxu0 %v996
        %v1015 = vpop.f32.mrf.mxu0
        %v1016 = vadd.f32 0.0, %v1015
        %1017 = vdwg.mxu0
        %v1019 = vsel %vm748, %v948, 0
        %1021 = vmatpush.msra.mxu0 0.0
        %1022 = vmatpush.msra.mxu0 0.0
        %1023 = vmatpush.msra.mxu0 0.0
        %1024 = vmatpush.msra.mxu0 0.0
        %1025 = vmatpush.msra.mxu0 0.0
        %1026 = vmatpush.msra.mxu0 0.0
        %1027 = vmatpush.msra.mxu0 0.0
        %1028 = vmatpush.msra.mxu0 0.0
        %1029 = vmatpush.msra.mxu0 0.0
        %1030 = vmatpush.msra.mxu0 0.0
        %1031 = vmatpush.msra.mxu0 0.0
        %1032 = vmatpush.msra.mxu0 0.0
        %1033 = vmatpush.msra.mxu0 0.0
        %1034 = vmatpush.msra.mxu0 0.0
        %1035 = vmatpush.msra.mxu0 0.0
        %1036 = vmatpush.msra.mxu0 %v747
        %1037 = vmatmul.f32.gmra.mxu0 %v1019
        %v1038 = vpop.f32.mrf.mxu0
        %v1039 = vadd.f32 0.0, %v1038
        %1040 = vdwg.mxu0
        %v1041 = vrot.slane %v1016, 4
        %v1042 = vsel %vm394, %v1041, %v970
        %v1043 = vrot.slane %v970, 4
        %v1044 = vsel %vm394, %v1016, %v1043
        %v1046 = vunpack.c.l.s4 1983009808
        %v1047 = vunpack.c.0.s8 %v1046
        %v1048 = vperm.slane %v1042, %v1047
        %v1050 = vunpack.c.l.s4 1983009808
        %v1051 = vunpack.c.0.s8 %v1050
        %v1052 = vperm.slane %v1044, %v1051
        %v1053 = vrot.slane %v1039, 4
        %v1054 = vsel %vm394, %v1053, %v993
        %v1055 = vrot.slane %v993, 4
        %v1056 = vsel %vm394, %v1039, %v1055
        %v1058 = vunpack.c.l.s4 1983009808
        %v1059 = vunpack.c.0.s8 %v1058
        %v1060 = vperm.slane %v1054, %v1059
        %v1062 = vunpack.c.l.s4 1983009808
        %v1063 = vunpack.c.0.s8 %v1062
        %v1064 = vperm.slane %v1056, %v1063
        %v1065 = vrot.slane %v1060, 4
        %v1066 = vsel %vm394, %v1065, %v1048
        %v1067 = vrot.slane %v1048, 4
        %v1068 = vsel %vm394, %v1060, %v1067
        %v1070 = vunpack.c.l.s4 1934713408
        %v1071 = vunpack.c.0.s8 %v1070
        %v1072 = vperm.slane %v1066, %v1071
        %v1074 = vunpack.c.l.s4 1934713408
        %v1075 = vunpack.c.0.s8 %v1074
        %v1076 = vperm.slane %v1068, %v1075
        %v1077 = vrot.slane %v1064, 4
        %v1078 = vsel %vm394, %v1077, %v1052
        %v1079 = vrot.slane %v1052, 4
        %v1080 = vsel %vm394, %v1064, %v1079
        %v1082 = vunpack.c.l.s4 1934713408
        %v1083 = vunpack.c.0.s8 %v1082
        %v1084 = vperm.slane %v1078, %v1083
        %v1086 = vunpack.c.l.s4 1934713408
        %v1087 = vunpack.c.0.s8 %v1086
        %v1088 = vperm.slane %v1080, %v1087
        %v1089 = vrot.slane %v1072, 4
        %v1090 = vsel %vm394, 0.0, %v1089
        %v1091 = vrot.slane %v1076, 4
        %v1092 = vsel %vm394, 0.0, %v1091
        %v1093 = vrot.slane %v1084, 4
        %v1094 = vsel %vm394, 0.0, %v1093
        %v1095 = vrot.slane %v1088, 4
        %v1096 = vsel %vm394, 0.0, %v1095
        %v1097 = vsel %vm394, %v1091, %v1072
        %v1099 = vunpack.c.l.s4 1983009808
        %v1100 = vunpack.c.0.s8 %v1099
        %v1101 = vperm.slane %v1097, %v1100
        %v1102 = vrot.slane %v1092, 4
        %v1103 = vsel %vm394, %v1102, %v1090
        %v1105 = vunpack.c.l.s4 1983009808
        %v1106 = vunpack.c.0.s8 %v1105
        %v1107 = vperm.slane %v1103, %v1106
        %v1108 = vsel %vm394, %v1095, %v1084
        %v1110 = vunpack.c.l.s4 1983009808
        %v1111 = vunpack.c.0.s8 %v1110
        %v1112 = vperm.slane %v1108, %v1111
        %v1113 = vrot.slane %v1096, 4
        %v1114 = vsel %vm394, %v1113, %v1094
        %v1116 = vunpack.c.l.s4 1983009808
        %v1117 = vunpack.c.0.s8 %v1116
        %v1118 = vperm.slane %v1114, %v1117
        %v1119 = vrot.slane %v1107, 4
        %v1120 = vsel %vm394, %v1119, %v1101
        %v1121 = vrot.slane %v1101, 4
        %v1122 = vsel %vm394, %v1107, %v1121
        %v1124 = vunpack.c.l.s4 1934713408
        %v1125 = vunpack.c.0.s8 %v1124
        %v1126 = vperm.slane %v1120, %v1125
        %v1128 = vunpack.c.l.s4 1934713408
        %v1129 = vunpack.c.0.s8 %v1128
        %v1130 = vperm.slane %v1122, %v1129
        %v1131 = vrot.slane %v1118, 4
        %v1132 = vsel %vm394, %v1131, %v1112
        %v1133 = vrot.slane %v1112, 4
        %v1134 = vsel %vm394, %v1118, %v1133
        %v1136 = vunpack.c.l.s4 1934713408
        %v1137 = vunpack.c.0.s8 %v1136
        %v1138 = vperm.slane %v1132, %v1137
        %v1140 = vunpack.c.l.s4 1934713408
        %v1141 = vunpack.c.0.s8 %v1140
        %v1142 = vperm.slane %v1134, %v1141
        %v1143 = vrot.slane %v1138, 4
        %v1144 = vsel %vm394, %v1143, %v1126
        %v1145 = vrot.slane %v1126, 4
        %v1146 = vsel %vm394, %v1138, %v1145
        %v1147 = vrot.slane %v1142, 4
        %v1148 = vsel %vm394, %v1147, %v1130
        %v1149 = vrot.slane %v1130, 4
        %v1150 = vsel %vm394, %v1142, %v1149
        %1152 = vrot.lane.b32.xlu0 %v1146, 8
        %v1153 = vpop.permute.xlu0 %1152
        %1156 = vrot.lane.b32.xlu0 %v1148, 16
        %v1157 = vpop.permute.xlu0 %1156
        %1160 = vrot.lane.b32.xlu0 %v1150, 24
        %v1161 = vpop.permute.xlu0 %1160
        %v1163 = vsel %vm748, %v1144, %v1153
        %vm1164 = vcmask 130048
        %v1165 = vsel %vm1164, %v1163, %v1157
        %vm1166 = vcmask 195584
        %v1167 = vsel %vm1166, %v1165, %v1161
        %v1168 = vld [vmem:[%s3] sm:$0xff]
        %v1169 = vld [vmem:[%s3 + $0x8] sm:$0xff]
        %v1170 = vld [vmem:[%s3 + $0x10] sm:$0xff]
        %v1171 = vld [vmem:[%s3 + $0x18] sm:$0xff]
        %v1172 = vld [vmem:[%s4] sm:$0x1]
        %v1174 = vperm.slane %v1172, 0
        %v1177 = vsel %vm359, %v1167, 0
        %1179 = vmatpush.msra.mxu0 0.0
        %1180 = vmatpush.msra.mxu0 0.0
        %1181 = vmatpush.msra.mxu0 0.0
        %1182 = vmatpush.msra.mxu0 0.0
        %1183 = vmatpush.msra.mxu0 0.0
        %1184 = vmatpush.msra.mxu0 0.0
        %1185 = vmatpush.msra.mxu0 0.0
        %1186 = vmatpush.msra.mxu0 0.0
        %1187 = vmatpush.msra.mxu0 0.0
        %1188 = vmatpush.msra.mxu0 0.0
        %1189 = vmatpush.msra.mxu0 0.0
        %1190 = vmatpush.msra.mxu0 0.0
        %1191 = vmatpush.msra.mxu0 %v1171
        %1192 = vmatpush.msra.mxu0 %v1170
        %1193 = vmatpush.msra.mxu0 %v1169
        %1194 = vmatpush.msra.mxu0 %v1168
        %1195 = vmatmul.f32.gmra.mxu0 %v1177
        %v1196 = vpop.f32.mrf.mxu0
        %v1197 = vadd.f32 %v1174, %v1196
        %1198 = vdwg.mxu0
        %v1199 = vadd.f32 %v350, %v1197
        %v1200 = vld [vmem:[%s5] sm:$0xff]
        %v1201 = vld [vmem:[%s5 + $0x8] sm:$0xff]
        %v1202 = vld [vmem:[%s5 + $0x10] sm:$0xff]
        %v1203 = vld [vmem:[%s5 + $0x18] sm:$0xff]
        %v1204 = vld [vmem:[%s6] sm:$0x1]
        %v1206 = vperm.slane %v1204, 0
        %v1209 = vsel %vm359, %v1199, 0
        %1211 = vmatpush.msra.mxu0 0.0
        %1212 = vmatpush.msra.mxu0 0.0
        %1213 = vmatpush.msra.mxu0 0.0
        %1214 = vmatpush.msra.mxu0 0.0
        %1215 = vmatpush.msra.mxu0 0.0
        %1216 = vmatpush.msra.mxu0 0.0
        %1217 = vmatpush.msra.mxu0 0.0
        %1218 = vmatpush.msra.mxu0 0.0
        %1219 = vmatpush.msra.mxu0 0.0
        %1220 = vmatpush.msra.mxu0 0.0
        %1221 = vmatpush.msra.mxu0 0.0
        %1222 = vmatpush.msra.mxu0 0.0
        %1223 = vmatpush.msra.mxu0 %v1203
        %1224 = vmatpush.msra.mxu0 %v1202
        %1225 = vmatpush.msra.mxu0 %v1201
        %1226 = vmatpush.msra.mxu0 %v1200
        %1227 = vmatmul.f32.gmra.mxu0 %v1209
        %v1228 = vpop.f32.mrf.mxu0
        %v1229 = vadd.f32 %v1206, %v1228
        %1230 = vdwg.mxu0
        %v1231 = vmax.f32 %v1229, 0.0
        %v1232 = vld [vmem:[%s7] sm:$0xff]
        %v1233 = vld [vmem:[%s7 + $0x8] sm:$0xff]
        %v1234 = vld [vmem:[%s7 + $0x10] sm:$0xff]
        %v1235 = vld [vmem:[%s7 + $0x18] sm:$0xff]
        %v1236 = vld [vmem:[%s7 + $0x20] sm:$0xff]
        %v1237 = vld [vmem:[%s7 + $0x28] sm:$0xff]
        %v1238 = vld [vmem:[%s7 + $0x30] sm:$0xff]
        %v1239 = vld [vmem:[%s7 + $0x38] sm:$0xff]
        %v1240 = vld [vmem:[%s8] sm:$0x1]
        %v1242 = vperm.slane %v1240, 0
        %vm1244 = vcmask 523264
        %v1246 = vsel %vm1244, %v1231, 0
        %1248 = vmatpush.msra.mxu0 0.0
        %1249 = vmatpush.msra.mxu0 0.0
        %1250 = vmatpush.msra.mxu0 0.0
        %1251 = vmatpush.msra.mxu0 0.0
        %1252 = vmatpush.msra.mxu0 0.0
        %1253 = vmatpush.msra.mxu0 0.0
        %1254 = vmatpush.msra.mxu0 0.0
        %1255 = vmatpush.msra.mxu0 0.0
        %1256 = vmatpush.msra.mxu0 %v1239
        %1257 = vmatpush.msra.mxu0 %v1238
        %1258 = vmatpush.msra.mxu0 %v1237
        %1259 = vmatpush.msra.mxu0 %v1236
        %1260 = vmatpush.msra.mxu0 %v1235
        %1261 = vmatpush.msra.mxu0 %v1234
        %1262 = vmatpush.msra.mxu0 %v1233
        %1263 = vmatpush.msra.mxu0 %v1232
        %1264 = vmatmul.f32.gmra.mxu0 %v1246
        %v1265 = vpop.f32.mrf.mxu0
        %v1266 = vadd.f32 %v1242, %v1265
        %1267 = vdwg.mxu0
        %v1268 = vadd.f32 %v1199, %v1266
        %1269 = vst.msk [vmem:[%s349] sm:$0xff] %vm359, %v1268
        %s1270 = sand.u32 %s228, 1
        %s1271 = scalar_lea.sflag [#allocation4], %s1270
        %s1272 = sand.u32 %s228, 1
        %s1273 = smul.addr %s1272, 8
        %s1274 = scalar_lea.vmem [#allocation5], %s1273
        // Predicated region
        $region61: #{tpu_custom_call.1} parent=55 // pred_check
          %p1275 = pneg %p238
        $region62: #{tpu_custom_call.1} parent=55 // pred_check_branch
          %1277 = sbr.rel (%p1275) target = $region64
        $region63: #{tpu_custom_call.1} parent=55 // pred_region
          %1279 = vsyncadd %s1271, 0
          %s1280 = smul.addr %s26, 8
          %s1281 = scalar_lea.hbm %s9, %s1280
          %s1283 = sshll.u32 %s1274, 4
          %s1284 = int_to_ptr.vmem [resolvable:$true] %s1283
          %s1285 = sshll.u32 %s1281, 4
          %s1286 = int_to_ptr.hbm [resolvable:$true] %s1285
          %1288 = dma.vmem_to_hbm [thread:$0]  %s1284, 128, %s1286, %s1271
        $region64: #{tpu_custom_call.1} parent=55 // pred_fallthru
          _
      $region56: #{tpu_custom_call.1} parent=5 // pred_fallthru
        _
      %p1289 = scmp.le.s32.totalorder 2, %s21
      // Predicated region
      $region65: #{tpu_custom_call.1} parent=5 // pred_check
        %p1290 = pneg %p1289
      $region66: #{tpu_custom_call.1} parent=5 // pred_check_branch
        %1292 = sbr.rel (%p1290) target = $region68
      $region67: #{tpu_custom_call.1} parent=5 // pred_region
        %s1293 = ssub.s32 %s21, 2
        // Predicated region
        $region69: #{tpu_custom_call.1} parent=67 // pred_check
          %p1294 = pneg %p244
        $region70: #{tpu_custom_call.1} parent=67 // pred_check_branch
          %1296 = sbr.rel (%p1294) target = $region72
        $region71: #{tpu_custom_call.1} parent=67 // pred_region
          %s1297 = sand.u32 %s229, 1
          %s1298 = scalar_lea.sflag [#allocation4], %s1297
          %s1299 = sand.u32 %s229, 1
          %s1300 = smul.addr %s1299, 8
          %s1301 = scalar_lea.vmem [#allocation5], %s1300
          %1303 = dma.done %s1298, 128
        $region72: #{tpu_custom_call.1} parent=67 // pred_fallthru
          _
      $region68: #{tpu_custom_call.1} parent=5 // pred_fallthru
        _
    $region6: #{tpu_custom_call.1} parent=1 // loop_footer
      %s25 = sadd.s32 1, %s21
    $region7: #{tpu_custom_call.1} parent=1 // loop_footer_branch
      %20 = sbr.rel target = $region3
    $region8: #{tpu_custom_call.1} parent=1 // loop_exit
      _
    %1304 = vsyncpa [#allocation3], 1
    %s1305 = scalar_lea.sflag [#allocation3], 1
    %1306 = vsyncpa %s1305, 1
    %1307 = vsyncpa [#allocation4], 1
    %s1308 = scalar_lea.sflag [#allocation4], 1
    %1309 = vsyncpa %s1308, 1

// kernel: tpu_custom_call.1
$region0: #{tpu_custom_call.1}
  #allocation0 [shape = 'u32[]', space=smem, size = 0x4, offset = 0x4, fixed_abs, tag = 'smem constant byte address 0x4 - core index']
  #allocation1 [shape = 'u32[72,128]{1,0:T(1,128)}', space=vmem, size = 0x9000, scoped, tag = 'internal scratch']
  %s0 = inlined_call_operand.hbm [shape: f32[2,8,32], index: 0, kind: input, shape index: {}]
  %s1 = inlined_call_operand.vmem [shape: f32[32,96], index: 1, kind: input, shape index: {}]
  %s2 = inlined_call_operand.vmem [shape: f32[1,96], index: 2, kind: input, shape index: {}]
  %s3 = inlined_call_operand.vmem [shape: f32[32,32], index: 3, kind: input, shape index: {}]
  %s4 = inlined_call_operand.vmem [shape: f32[1,32], index: 4, kind: input, shape index: {}]
  %s5 = inlined_call_operand.vmem [shape: f32[32,64], index: 5, kind: input, shape index: {}]
  %s6 = inlined_call_operand.vmem [shape: f32[1,64], index: 6, kind: input, shape index: {}]
  %s7 = inlined_call_operand.vmem [shape: f32[64,32], index: 7, kind: input, shape index: {}]
  %s8 = inlined_call_operand.vmem [shape: f32[1,32], index: 8, kind: input, shape index: {}]
  %s9 = inlined_call_operand.hbm [shape: f32[2,8,32], index: 9, kind: output, shape index: {}]
  %s10 = sld [smem:[#allocation0]]
  $region73: #{tpu_custom_call.1} parent=0
    _
  %s12 = ssub.s32 1, %s10
  %s13 = scalar_select 0, %s12, %s10
  $region1: #{tpu_custom_call.1} parent=0
    #allocation2 [shape = 'u8[8192]{0}', space=vmem, size = 0x2000, scoped, tag = 'input window, operand 0']
    #allocation3 [shape = 's32[2]{0}', space=sflag, size = 0x8, scoped, tag = 'scoped memory for tpu_custom_call.1']
    #allocation4 [shape = 's32[2]{0}', space=sflag, size = 0x8, scoped, tag = 'scoped memory for tpu_custom_call.1']
    #allocation5 [shape = 'u8[8192]{0}', space=vmem, size = 0x2000, scoped, tag = 'output window, operand 0']
    %14 = vsyncpa [#allocation3], 0
    %s15 = scalar_lea.sflag [#allocation3], 1
    %16 = vsyncpa %s15, 0
    %17 = vsyncpa [#allocation4], 0
    %s18 = scalar_lea.sflag [#allocation4], 1
    %19 = vsyncpa %s18, 0
    loop: start=0, step=1, limit=4
    $region2: #{tpu_custom_call.1} parent=1 // loop_pre_header
      _
    $region3: #{tpu_custom_call.1} parent=1 // loop_header
      %s21 = sphi 0, %s25
      %p22 = scmp.ge.s32.totalorder %s21, 4
      %s31 = sphi 0, %s33
      %s34 = sphi 0, %s31
      %s35 = sphi 0, %s34
      %s51 = sphi 0, %s35
      %s55 = sphi 0, %s55
      %s57 = sphi 0, %s55
      %s58 = sphi 0, %s57
      %s72 = sphi 0, %s58
      %s76 = sphi 0, %s76
      %s78 = sphi 0, %s76
      %s79 = sphi 0, %s78
      %s93 = sphi 0, %s79
      %s97 = sphi 0, %s97
      %s99 = sphi 0, %s97
      %s100 = sphi 0, %s99
      %s114 = sphi 0, %s100
      %s118 = sphi 0, %s118
      %s120 = sphi 0, %s118
      %s121 = sphi 0, %s120
      %s135 = sphi 0, %s121
      %s139 = sphi 0, %s139
      %s141 = sphi 0, %s139
      %s142 = sphi 0, %s141
      %s156 = sphi 0, %s142
      %s160 = sphi 0, %s160
      %s162 = sphi 0, %s160
      %s163 = sphi 0, %s162
      %s177 = sphi 0, %s163
      %s181 = sphi 0, %s181
      %s183 = sphi 0, %s181
      %s184 = sphi 0, %s183
      %s198 = sphi 0, %s184
      %s202 = sphi 0, %s202
      %s204 = sphi 0, %s202
      %s205 = sphi 0, %s204
      %s219 = sphi 0, %s205
      %s225 = sphi 0, %s227
      %s228 = sphi 0, %s225
      %s229 = sphi 0, %s228
      %s245 = sphi 0, %s229
    $region4: #{tpu_custom_call.1} parent=1 // loop_header_branch
      %24 = sbr.rel (%p22) target = $region8
    $region5: #{tpu_custom_call.1} parent=1 // loop_body
      %s26 = ssub.s32 %s21, 1
      %s27 = ssub.s32 %s21, 2
      %s28 = sadd.s32 %s21, 1
      %s29 = ssub.s32 %s21, %s28
      %p30 = scmp.eq.s32.totalorder %s29, 0
      %s32 = sadd.s32 %s31, 1
      %s33 = scalar_select %p30, %s31, %s32
      %p36 = pneg %p30
      %p37 = scmp.eq.s32.totalorder %s21, 1
      %p38 = por %p36, %p37
      %p39 = scmp.ne.s32.totalorder %s31, %s34
      %p40 = scmp.eq.s32.totalorder %s21, 0
      %p41 = por %p39, %p40
      %p42 = scmp.ne.s32.totalorder %s31, %s34
      %p43 = scmp.eq.s32.totalorder %s26, 1
      %p44 = por %p42, %p43
      %p45 = scmp.ne.s32.totalorder %s34, %s35
      %p46 = scmp.eq.s32.totalorder %s26, 0
      %p47 = por %p45, %p46
      %p48 = scmp.ne.s32.totalorder %s34, %s35
      %p49 = scmp.eq.s32.totalorder %s27, 1
      %p50 = por %p48, %p49
      %p52 = scmp.ne.s32.totalorder %s35, %s51
      %p53 = scmp.eq.s32.totalorder %s27, 0
      %p54 = por %p52, %p53
      %s56 = sadd.s32 %s55, 1
      %p59 = scmp.eq.s32.totalorder %s21, 1
      %p60 = scmp.ne.s32.totalorder %s55, %s57
      %p61 = scmp.eq.s32.totalorder %s21, 0
      %p62 = por %p60, %p61
      %p63 = scmp.ne.s32.totalorder %s55, %s57
      %p64 = scmp.eq.s32.totalorder %s26, 1
      %p65 = por %p63, %p64
      %p66 = scmp.ne.s32.totalorder %s57, %s58
      %p67 = scmp.eq.s32.totalorder %s26, 0
      %p68 = por %p66, %p67
      %p69 = scmp.ne.s32.totalorder %s57, %s58
      %p70 = scmp.eq.s32.totalorder %s27, 1
      %p71 = por %p69, %p70
      %p73 = scmp.ne.s32.totalorder %s58, %s72
      %p74 = scmp.eq.s32.totalorder %s27, 0
      %p75 = por %p73, %p74
      %s77 = sadd.s32 %s76, 1
      %p80 = scmp.eq.s32.totalorder %s21, 1
      %p81 = scmp.ne.s32.totalorder %s76, %s78
      %p82 = scmp.eq.s32.totalorder %s21, 0
      %p83 = por %p81, %p82
      %p84 = scmp.ne.s32.totalorder %s76, %s78
      %p85 = scmp.eq.s32.totalorder %s26, 1
      %p86 = por %p84, %p85
      %p87 = scmp.ne.s32.totalorder %s78, %s79
      %p88 = scmp.eq.s32.totalorder %s26, 0
      %p89 = por %p87, %p88
      %p90 = scmp.ne.s32.totalorder %s78, %s79
      %p91 = scmp.eq.s32.totalorder %s27, 1
      %p92 = por %p90, %p91
      %p94 = scmp.ne.s32.totalorder %s79, %s93
      %p95 = scmp.eq.s32.totalorder %s27, 0
      %p96 = por %p94, %p95
      %s98 = sadd.s32 %s97, 1
      %p101 = scmp.eq.s32.totalorder %s21, 1
      %p102 = scmp.ne.s32.totalorder %s97, %s99
      %p103 = scmp.eq.s32.totalorder %s21, 0
      %p104 = por %p102, %p103
      %p105 = scmp.ne.s32.totalorder %s97, %s99
      %p106 = scmp.eq.s32.totalorder %s26, 1
      %p107 = por %p105, %p106
      %p108 = scmp.ne.s32.totalorder %s99, %s100
      %p109 = scmp.eq.s32.totalorder %s26, 0
      %p110 = por %p108, %p109
      %p111 = scmp.ne.s32.totalorder %s99, %s100
      %p112 = scmp.eq.s32.totalorder %s27, 1
      %p113 = por %p111, %p112
      %p115 = scmp.ne.s32.totalorder %s100, %s114
      %p116 = scmp.eq.s32.totalorder %s27, 0
      %p117 = por %p115, %p116
      %s119 = sadd.s32 %s118, 1
      %p122 = scmp.eq.s32.totalorder %s21, 1
      %p123 = scmp.ne.s32.totalorder %s118, %s120
      %p124 = scmp.eq.s32.totalorder %s21, 0
      %p125 = por %p123, %p124
      %p126 = scmp.ne.s32.totalorder %s118, %s120
      %p127 = scmp.eq.s32.totalorder %s26, 1
      %p128 = por %p126, %p127
      %p129 = scmp.ne.s32.totalorder %s120, %s121
      %p130 = scmp.eq.s32.totalorder %s26, 0
      %p131 = por %p129, %p130
      %p132 = scmp.ne.s32.totalorder %s120, %s121
      %p133 = scmp.eq.s32.totalorder %s27, 1
      %p134 = por %p132, %p133
      %p136 = scmp.ne.s32.totalorder %s121, %s135
      %p137 = scmp.eq.s32.totalorder %s27, 0
      %p138 = por %p136, %p137
      %s140 = sadd.s32 %s139, 1
      %p143 = scmp.eq.s32.totalorder %s21, 1
      %p144 = scmp.ne.s32.totalorder %s139, %s141
      %p145 = scmp.eq.s32.totalorder %s21, 0
      %p146 = por %p144, %p145
      %p147 = scmp.ne.s32.totalorder %s139, %s141
      %p148 = scmp.eq.s32.totalorder %s26, 1
      %p149 = por %p147, %p148
      %p150 = scmp.ne.s32.totalorder %s141, %s142
      %p151 = scmp.eq.s32.totalorder %s26, 0
      %p152 = por %p150, %p151
      %p153 = scmp.ne.s32.totalorder %s141, %s142
      %p154 = scmp.eq.s32.totalorder %s27, 1
      %p155 = por %p153, %p154
      %p157 = scmp.ne.s32.totalorder %s142, %s156
      %p158 = scmp.eq.s32.totalorder %s27, 0
      %p159 = por %p157, %p158
      %s161 = sadd.s32 %s160, 1
      %p164 = scmp.eq.s32.totalorder %s21, 1
      %p165 = scmp.ne.s32.totalorder %s160, %s162
      %p166 = scmp.eq.s32.totalorder %s21, 0
      %p167 = por %p165, %p166
      %p168 = scmp.ne.s32.totalorder %s160, %s162
      %p169 = scmp.eq.s32.totalorder %s26, 1
      %p170 = por %p168, %p169
      %p171 = scmp.ne.s32.totalorder %s162, %s163
      %p172 = scmp.eq.s32.totalorder %s26, 0
      %p173 = por %p171, %p172
      %p174 = scmp.ne.s32.totalorder %s162, %s163
      %p175 = scmp.eq.s32.totalorder %s27, 1
      %p176 = por %p174, %p175
      %p178 = scmp.ne.s32.totalorder %s163, %s177
      %p179 = scmp.eq.s32.totalorder %s27, 0
      %p180 = por %p178, %p179
      %s182 = sadd.s32 %s181, 1
      %p185 = scmp.eq.s32.totalorder %s21, 1
      %p186 = scmp.ne.s32.totalorder %s181, %s183
      %p187 = scmp.eq.s32.totalorder %s21, 0
      %p188 = por %p186, %p187
      %p189 = scmp.ne.s32.totalorder %s181, %s183
      %p190 = scmp.eq.s32.totalorder %s26, 1
      %p191 = por %p189, %p190
      %p192 = scmp.ne.s32.totalorder %s183, %s184
      %p193 = scmp.eq.s32.totalorder %s26, 0
      %p194 = por %p192, %p193
      %p195 = scmp.ne.s32.totalorder %s183, %s184
      %p196 = scmp.eq.s32.totalorder %s27, 1
      %p197 = por %p195, %p196
      %p199 = scmp.ne.s32.totalorder %s184, %s198
      %p200 = scmp.eq.s32.totalorder %s27, 0
      %p201 = por %p199, %p200
      %s203 = sadd.s32 %s202, 1
      %p206 = scmp.eq.s32.totalorder %s21, 1
      %p207 = scmp.ne.s32.totalorder %s202, %s204
      %p208 = scmp.eq.s32.totalorder %s21, 0
      %p209 = por %p207, %p208
      %p210 = scmp.ne.s32.totalorder %s202, %s204
      %p211 = scmp.eq.s32.totalorder %s26, 1
      %p212 = por %p210, %p211
      %p213 = scmp.ne.s32.totalorder %s204, %s205
      %p214 = scmp.eq.s32.totalorder %s26, 0
      %p215 = por %p213, %p214
      %p216 = scmp.ne.s32.totalorder %s204, %s205
      %p217 = scmp.eq.s32.totalorder %s27, 1
      %p218 = por %p216, %p217
      %p220 = scmp.ne.s32.totalorder %s205, %s219
      %p221 = scmp.eq.s32.totalorder %s27, 0
      %p222 = por %p220, %p221
      %s223 = ssub.s32 %s21, %s28
      %p224 = scmp.eq.s32.totalorder %s223, 0
      %s226 = sadd.s32 %s225, 1
      %s227 = scalar_select %p224, %s225, %s226
      %p230 = pneg %p224
      %p231 = scmp.eq.s32.totalorder %s21, 1
      %p232 = por %p230, %p231
      %p233 = scmp.ne.s32.totalorder %s225, %s228
      %p234 = scmp.eq.s32.totalorder %s21, 0
      %p235 = por %p233, %p234
      %p236 = scmp.ne.s32.totalorder %s225, %s228
      %p237 = scmp.eq.s32.totalorder %s26, 1
      %p238 = por %p236, %p237
      %p239 = scmp.ne.s32.totalorder %s228, %s229
      %p240 = scmp.eq.s32.totalorder %s26, 0
      %p241 = por %p239, %p240
      %p242 = scmp.ne.s32.totalorder %s228, %s229
      %p243 = scmp.eq.s32.totalorder %s27, 1
      %p244 = por %p242, %p243
      %p246 = scmp.ne.s32.totalorder %s229, %s245
      %p247 = scmp.eq.s32.totalorder %s27, 0
      %p248 = por %p246, %p247
      %p249 = scmp.le.s32.totalorder 1, %s21
      %p250 = scmp.lt.s32.totalorder %s21, 3
      %p251 = pnand %p249, %p250
      %p252 = pneg %p251
      // Predicated region
      $region9: #{tpu_custom_call.1} parent=5 // pred_check
        _
      $region10: #{tpu_custom_call.1} parent=5 // pred_check_branch
        %254 = sbr.rel (%p251) target = $region12
      $region11: #{tpu_custom_call.1} parent=5 // pred_region
        %s255 = ssub.s32 %s21, 1
        // Predicated region
        $region13: #{tpu_custom_call.1} parent=11 // pred_check
          %p256 = pneg %p68
        $region14: #{tpu_custom_call.1} parent=11 // pred_check_branch
          %258 = sbr.rel (%p256) target = $region16
        $region15: #{tpu_custom_call.1} parent=11 // pred_region
          _
        $region16: #{tpu_custom_call.1} parent=11 // pred_fallthru
          _
        // Predicated region
        $region17: #{tpu_custom_call.1} parent=11 // pred_check
          %p259 = pneg %p89
        $region18: #{tpu_custom_call.1} parent=11 // pred_check_branch
          %261 = sbr.rel (%p259) target = $region20
        $region19: #{tpu_custom_call.1} parent=11 // pred_region
          _
        $region20: #{tpu_custom_call.1} parent=11 // pred_fallthru
          _
        // Predicated region
        $region21: #{tpu_custom_call.1} parent=11 // pred_check
          %p262 = pneg %p110
        $region22: #{tpu_custom_call.1} parent=11 // pred_check_branch
          %264 = sbr.rel (%p262) target = $region24
        $region23: #{tpu_custom_call.1} parent=11 // pred_region
          _
        $region24: #{tpu_custom_call.1} parent=11 // pred_fallthru
          _
        // Predicated region
        $region25: #{tpu_custom_call.1} parent=11 // pred_check
          %p265 = pneg %p131
        $region26: #{tpu_custom_call.1} parent=11 // pred_check_branch
          %267 = sbr.rel (%p265) target = $region28
        $region27: #{tpu_custom_call.1} parent=11 // pred_region
          _
        $region28: #{tpu_custom_call.1} parent=11 // pred_fallthru
          _
        // Predicated region
        $region29: #{tpu_custom_call.1} parent=11 // pred_check
          %p268 = pneg %p152
        $region30: #{tpu_custom_call.1} parent=11 // pred_check_branch
          %270 = sbr.rel (%p268) target = $region32
        $region31: #{tpu_custom_call.1} parent=11 // pred_region
          _
        $region32: #{tpu_custom_call.1} parent=11 // pred_fallthru
          _
        // Predicated region
        $region33: #{tpu_custom_call.1} parent=11 // pred_check
          %p271 = pneg %p173
        $region34: #{tpu_custom_call.1} parent=11 // pred_check_branch
          %273 = sbr.rel (%p271) target = $region36
        $region35: #{tpu_custom_call.1} parent=11 // pred_region
          _
        $region36: #{tpu_custom_call.1} parent=11 // pred_fallthru
          _
        // Predicated region
        $region37: #{tpu_custom_call.1} parent=11 // pred_check
          %p274 = pneg %p194
        $region38: #{tpu_custom_call.1} parent=11 // pred_check_branch
          %276 = sbr.rel (%p274) target = $region40
        $region39: #{tpu_custom_call.1} parent=11 // pred_region
          _
        $region40: #{tpu_custom_call.1} parent=11 // pred_fallthru
          _
        // Predicated region
        $region41: #{tpu_custom_call.1} parent=11 // pred_check
          %p277 = pneg %p215
        $region42: #{tpu_custom_call.1} parent=11 // pred_check_branch
          %279 = sbr.rel (%p277) target = $region44
        $region43: #{tpu_custom_call.1} parent=11 // pred_region
          _
        $region44: #{tpu_custom_call.1} parent=11 // pred_fallthru
          _
      $region12: #{tpu_custom_call.1} parent=5 // pred_fallthru
        _
      %p280 = scmp.lt.s32.totalorder %s21, 2
      // Predicated region
      $region45: #{tpu_custom_call.1} parent=5 // pred_check
        %p281 = pneg %p280
      $region46: #{tpu_custom_call.1} parent=5 // pred_check_branch
        %283 = sbr.rel (%p281) target = $region48
      $region47: #{tpu_custom_call.1} parent=5 // pred_region
        // Predicated region
        $region49: #{tpu_custom_call.1} parent=47 // pred_check
          %p284 = pneg %p41
        $region50: #{tpu_custom_call.1} parent=47 // pred_check_branch
          %286 = sbr.rel (%p284) target = $region52
        $region51: #{tpu_custom_call.1} parent=47 // pred_region
          %s287 = sand.u32 %s31, 1
          %s288 = scalar_lea.sflag [#allocation3], %s287
          %s289 = sand.u32 %s31, 1
          %s290 = smul.addr %s289, 8
          %s291 = scalar_lea.vmem [#allocation2], %s290
          %293 = vsyncadd %s288, 0
          %s294 = smul.addr %s21, 8
          %s295 = scalar_lea.hbm %s0, %s294
          %s297 = sshll.u32 %s295, 4
          %s298 = int_to_ptr.hbm [resolvable:$true] %s297
          %s299 = sshll.u32 %s291, 4
          %s300 = int_to_ptr.vmem [resolvable:$true] %s299
          %302 = dma.hbm_to_vmem [thread:$0]  %s298, 128, %s300, %s288
        $region52: #{tpu_custom_call.1} parent=47 // pred_fallthru
          _
      $region48: #{tpu_custom_call.1} parent=5 // pred_fallthru
        _
      %p303 = scmp.le.s32.totalorder 1, %s21
      %p304 = scmp.lt.s32.totalorder %s21, 3
      %p305 = pnand %p303, %p304
      %p306 = pneg %p305
      // Predicated region
      $region53: #{tpu_custom_call.1} parent=5 // pred_check
        _
      $region54: #{tpu_custom_call.1} parent=5 // pred_check_branch
        %308 = sbr.rel (%p305) target = $region56
      $region55: #{tpu_custom_call.1} parent=5 // pred_region
        %s309 = ssub.s32 %s21, 1
        %s310 = sand.u32 %s34, 1
        %s311 = scalar_lea.sflag [#allocation3], %s310
        %s312 = sand.u32 %s34, 1
        %s313 = smul.addr %s312, 8
        %s314 = scalar_lea.vmem [#allocation2], %s313
        // Predicated region
        $region57: #{tpu_custom_call.1} parent=55 // pred_check
          %p315 = pneg %p47
        $region58: #{tpu_custom_call.1} parent=55 // pred_check_branch
          %317 = sbr.rel (%p315) target = $region60
        $region59: #{tpu_custom_call.1} parent=55 // pred_region
          %319 = dma.done %s311, 128
        $region60: #{tpu_custom_call.1} parent=55 // pred_fallthru
          _
        %s320 = sand.u32 %s34, 1
        %s321 = scalar_lea.sflag [#allocation3], %s320
        %s322 = sand.u32 %s34, 1
        %s323 = smul.addr %s322, 8
        %s324 = scalar_lea.vmem [#allocation2], %s323
        %p325 = pneg %p47
        %p326 = pneg %p44
        %p327 = pneg %p68
        %p328 = pneg %p65
        %p329 = pneg %p89
        %p330 = pneg %p86
        %p331 = pneg %p110
        %p332 = pneg %p107
        %p333 = pneg %p131
        %p334 = pneg %p128
        %p335 = pneg %p152
        %p336 = pneg %p149
        %p337 = pneg %p173
        %p338 = pneg %p170
        %p339 = pneg %p194
        %p340 = pneg %p191
        %p341 = pneg %p215
        %p342 = pneg %p212
        %p343 = pneg %p241
        %p344 = pneg %p238
        %s345 = sand.u32 %s228, 1
        %s346 = scalar_lea.sflag [#allocation4], %s345
        %s347 = sand.u32 %s228, 1
        %s348 = smul.addr %s347, 8
        %s349 = scalar_lea.vmem [#allocation5], %s348
        %v350 = vld [vmem:[%s314] sm:$0xff]
        %v351 = vld [vmem:[%s1] sm:$0xff]
        %v352 = vld [vmem:[%s1 + $0x8] sm:$0xff]
        %v353 = vld [vmem:[%s1 + $0x10] sm:$0xff]
        %v354 = vld [vmem:[%s1 + $0x18] sm:$0xff]
        %v355 = vld [vmem:[%s2] sm:$0x1]
        %v357 = vperm.slane %v355, 0
        %vm359 = vcmask 261120
        %v361 = vsel %vm359, %v350, 0
        %363 = vmatpush.msra.mxu0 0.0
        %364 = vmatpush.msra.mxu0 0.0
        %365 = vmatpush.msra.mxu0 0.0
        %366 = vmatpush.msra.mxu0 0.0
        %367 = vmatpush.msra.mxu0 0.0
        %368 = vmatpush.msra.mxu0 0.0
        %369 = vmatpush.msra.mxu0 0.0
        %370 = vmatpush.msra.mxu0 0.0
        %371 = vmatpush.msra.mxu0 0.0
        %372 = vmatpush.msra.mxu0 0.0
        %373 = vmatpush.msra.mxu0 0.0
        %374 = vmatpush.msra.mxu0 0.0
        %375 = vmatpush.msra.mxu0 %v354
        %376 = vmatpush.msra.mxu0 %v353
        %377 = vmatpush.msra.mxu0 %v352
        %378 = vmatpush.msra.mxu0 %v351
        %379 = vmatmul.f32.gmra.mxu0 %v361
        %v380 = vpop.f32.mrf.mxu0
        %v381 = vadd.f32 %v357, %v380
        %382 = vdwg.mxu0
        %384 = vrot.lane.b32.xlu0 %v381, 120
        %v385 = vpop.permute.xlu0 %384
        %387 = vrot.lane.b32.xlu0 %v381, 112
        %v388 = vpop.permute.xlu0 %387
        %390 = vrot.lane.b32.xlu0 %v381, 104
        %v391 = vpop.permute.xlu0 %390
        %v393 = vrot.slane %v388, 4
        %vm394 = vcmask 1047556
        %v395 = vsel %vm394, %v393, %v381
        %v396 = vrot.slane %v381, 4
        %v397 = vsel %vm394, %v388, %v396
        %v399 = vunpack.c.l.s4 1983009808
        %v400 = vunpack.c.0.s8 %v399
        %v401 = vperm.slane %v395, %v400
        %v403 = vunpack.c.l.s4 1983009808
        %v404 = vunpack.c.0.s8 %v403
        %v405 = vperm.slane %v397, %v404
        %v406 = vrot.slane %v391, 4
        %v407 = vsel %vm394, %v406, %v385
        %v408 = vrot.slane %v385, 4
        %v409 = vsel %vm394, %v391, %v408
        %v411 = vunpack.c.l.s4 1983009808
        %v412 = vunpack.c.0.s8 %v411
        %v413 = vperm.slane %v407, %v412
        %v415 = vunpack.c.l.s4 1983009808
        %v416 = vunpack.c.0.s8 %v415
        %v417 = vperm.slane %v409, %v416
        %v418 = vrot.slane %v413, 4
        %v419 = vsel %vm394, %v418, %v401
        %v420 = vrot.slane %v401, 4
        %v421 = vsel %vm394, %v413, %v420
        %v423 = vunpack.c.l.s4 1934713408
        %v424 = vunpack.c.0.s8 %v423
        %v425 = vperm.slane %v419, %v424
        %v427 = vunpack.c.l.s4 1934713408
        %v428 = vunpack.c.0.s8 %v427
        %v429 = vperm.slane %v421, %v428
        %v430 = vrot.slane %v417, 4
        %v431 = vsel %vm394, %v430, %v405
        %v432 = vrot.slane %v405, 4
        %v433 = vsel %vm394, %v417, %v432
        %v435 = vunpack.c.l.s4 1934713408
        %v436 = vunpack.c.0.s8 %v435
        %v437 = vperm.slane %v431, %v436
        %v439 = vunpack.c.l.s4 1934713408
        %v440 = vunpack.c.0.s8 %v439
        %v441 = vperm.slane %v433, %v440
        %v442 = vrot.slane %v425, 4
        %v443 = vsel %vm394, 0.0, %v442
        %v444 = vrot.slane %v429, 4
        %v445 = vsel %vm394, 0.0, %v444
        %v446 = vrot.slane %v437, 4
        %v447 = vsel %vm394, 0.0, %v446
        %v448 = vrot.slane %v441, 4
        %v449 = vsel %vm394, 0.0, %v448
        %v450 = vsel %vm394, %v444, %v425
        %v452 = vunpack.c.l.s4 1983009808
        %v453 = vunpack.c.0.s8 %v452
        %v454 = vperm.slane %v450, %v453
        %v455 = vrot.slane %v445, 4
        %v456 = vsel %vm394, %v455, %v443
        %v458 = vunpack.c.l.s4 1983009808
        %v459 = vunpack.c.0.s8 %v458
        %v460 = vperm.slane %v456, %v459
        %v461 = vsel %vm394, %v448, %v437
        %v463 = vunpack.c.l.s4 1983009808
        %v464 = vunpack.c.0.s8 %v463
        %v465 = vperm.slane %v461, %v464
        %v466 = vrot.slane %v449, 4
        %v467 = vsel %vm394, %v466, %v447
        %v469 = vunpack.c.l.s4 1983009808
        %v470 = vunpack.c.0.s8 %v469
        %v471 = vperm.slane %v467, %v470
        %v472 = vrot.slane %v460, 4
        %v473 = vsel %vm394, %v472, %v454
        %v474 = vrot.slane %v454, 4
        %v475 = vsel %vm394, %v460, %v474
        %v477 = vunpack.c.l.s4 1934713408
        %v478 = vunpack.c.0.s8 %v477
        %v479 = vperm.slane %v473, %v478
        %v481 = vunpack.c.l.s4 1934713408
        %v482 = vunpack.c.0.s8 %v481
        %v483 = vperm.slane %v475, %v482
        %v484 = vrot.slane %v471, 4
        %v485 = vsel %vm394, %v484, %v465
        %v486 = vrot.slane %v465, 4
        %v487 = vsel %vm394, %v471, %v486
        %v489 = vunpack.c.l.s4 1934713408
        %v490 = vunpack.c.0.s8 %v489
        %v491 = vperm.slane %v485, %v490
        %v493 = vunpack.c.l.s4 1934713408
        %v494 = vunpack.c.0.s8 %v493
        %v495 = vperm.slane %v487, %v494
        %v496 = vrot.slane %v491, 4
        %v497 = vsel %vm394, %v496, %v479
        %v498 = vrot.slane %v479, 4
        %v499 = vsel %vm394, %v491, %v498
        %v500 = vrot.slane %v495, 4
        %v501 = vsel %vm394, %v500, %v483
        %v502 = vrot.slane %v483, 4
        %v503 = vsel %vm394, %v495, %v502
        %504 = vrot.lane.b32.xlu0 %v381, 96
        %v505 = vpop.permute.xlu0 %504
        %506 = vrot.lane.b32.xlu0 %v385, 96
        %v507 = vpop.permute.xlu0 %506
        %508 = vrot.lane.b32.xlu0 %v388, 96
        %v509 = vpop.permute.xlu0 %508
        %510 = vrot.lane.b32.xlu0 %v391, 96
        %v511 = vpop.permute.xlu0 %510
        %v516 = vrot.slane %v509, 4
        %v517 = vsel %vm394, %v516, %v505
        %v518 = vrot.slane %v505, 4
        %v519 = vsel %vm394, %v509, %v518
        %v521 = vunpack.c.l.s4 1983009808
        %v522 = vunpack.c.0.s8 %v521
        %v523 = vperm.slane %v517, %v522
        %v525 = vunpack.c.l.s4 1983009808
        %v526 = vunpack.c.0.s8 %v525
        %v527 = vperm.slane %v519, %v526
        %v528 = vrot.slane %v511, 4
        %v529 = vsel %vm394, %v528, %v507
        %v530 = vrot.slane %v507, 4
        %v531 = vsel %vm394, %v511, %v530
        %v533 = vunpack.c.l.s4 1983009808
        %v534 = vunpack.c.0.s8 %v533
        %v535 = vperm.slane %v529, %v534
        %v537 = vunpack.c.l.s4 1983009808
        %v538 = vunpack.c.0.s8 %v537
        %v539 = vperm.slane %v531, %v538
        %v540 = vrot.slane %v535, 4
        %v541 = vsel %vm394, %v540, %v523
        %v542 = vrot.slane %v523, 4
        %v543 = vsel %vm394, %v535, %v542
        %v545 = vunpack.c.l.s4 1934713408
        %v546 = vunpack.c.0.s8 %v545
        %v547 = vperm.slane %v541, %v546
        %v549 = vunpack.c.l.s4 1934713408
        %v550 = vunpack.c.0.s8 %v549
        %v551 = vperm.slane %v543, %v550
        %v552 = vrot.slane %v539, 4
        %v553 = vsel %vm394, %v552, %v527
        %v554 = vrot.slane %v527, 4
        %v555 = vsel %vm394, %v539, %v554
        %v557 = vunpack.c.l.s4 1934713408
        %v558 = vunpack.c.0.s8 %v557
        %v559 = vperm.slane %v553, %v558
        %v561 = vunpack.c.l.s4 1934713408
        %v562 = vunpack.c.0.s8 %v561
        %v563 = vperm.slane %v555, %v562
        %v564 = vrot.slane %v547, 4
        %v565 = vsel %vm394, 0.0, %v564
        %v566 = vrot.slane %v551, 4
        %v567 = vsel %vm394, 0.0, %v566
        %v568 = vrot.slane %v559, 4
        %v569 = vsel %vm394, 0.0, %v568
        %v570 = vrot.slane %v563, 4
        %v571 = vsel %vm394, 0.0, %v570
        %v572 = vsel %vm394, %v566, %v547
        %v574 = vunpack.c.l.s4 1983009808
        %v575 = vunpack.c.0.s8 %v574
        %v576 = vperm.slane %v572, %v575
        %v577 = vrot.slane %v567, 4
        %v578 = vsel %vm394, %v577, %v565
        %v580 = vunpack.c.l.s4 1983009808
        %v581 = vunpack.c.0.s8 %v580
        %v582 = vperm.slane %v578, %v581
        %v583 = vsel %vm394, %v570, %v559
        %v585 = vunpack.c.l.s4 1983009808
        %v586 = vunpack.c.0.s8 %v585
        %v587 = vperm.slane %v583, %v586
        %v588 = vrot.slane %v571, 4
        %v589 = vsel %vm394, %v588, %v569
        %v591 = vunpack.c.l.s4 1983009808
        %v592 = vunpack.c.0.s8 %v591
        %v593 = vperm.slane %v589, %v592
        %v594 = vrot.slane %v582, 4
        %v595 = vsel %vm394, %v594, %v576
        %v596 = vrot.slane %v576, 4
        %v597 = vsel %vm394, %v582, %v596
        %v599 = vunpack.c.l.s4 1934713408
        %v600 = vunpack.c.0.s8 %v599
        %v601 = vperm.slane %v595, %v600
        %v603 = vunpack.c.l.s4 1934713408
        %v604 = vunpack.c.0.s8 %v603
        %v605 = vperm.slane %v597, %v604
        %v606 = vrot.slane %v593, 4
        %v607 = vsel %vm394, %v606, %v587
        %v608 = vrot.slane %v587, 4
        %v609 = vsel %vm394, %v593, %v608
        %v611 = vunpack.c.l.s4 1934713408
        %v612 = vunpack.c.0.s8 %v611
        %v613 = vperm.slane %v607, %v612
        %v615 = vunpack.c.l.s4 1934713408
        %v616 = vunpack.c.0.s8 %v615
        %v617 = vperm.slane %v609, %v616
        %v618 = vrot.slane %v613, 4
        %v619 = vsel %vm394, %v618, %v601
        %v620 = vrot.slane %v601, 4
        %v621 = vsel %vm394, %v613, %v620
        %v622 = vrot.slane %v617, 4
        %v623 = vsel %vm394, %v622, %v605
        %v624 = vrot.slane %v605, 4
        %v625 = vsel %vm394, %v617, %v624
        %626 = vrot.lane.b32.xlu0 %v381, 64
        %v627 = vpop.permute.xlu0 %626
        %628 = vrot.lane.b32.xlu0 %v385, 64
        %v629 = vpop.permute.xlu0 %628
        %630 = vrot.lane.b32.xlu0 %v388, 64
        %v631 = vpop.permute.xlu0 %630
        %632 = vrot.lane.b32.xlu0 %v391, 64
        %v633 = vpop.permute.xlu0 %632
        %v638 = vrot.slane %v631, 4
        %v639 = vsel %vm394, %v638, %v627
        %v640 = vrot.slane %v627, 4
        %v641 = vsel %vm394, %v631, %v640
        %v643 = vunpack.c.l.s4 1983009808
        %v644 = vunpack.c.0.s8 %v643
        %v645 = vperm.slane %v639, %v644
        %v647 = vunpack.c.l.s4 1983009808
        %v648 = vunpack.c.0.s8 %v647
        %v649 = vperm.slane %v641, %v648
        %v650 = vrot.slane %v633, 4
        %v651 = vsel %vm394, %v650, %v629
        %v652 = vrot.slane %v629, 4
        %v653 = vsel %vm394, %v633, %v652
        %v655 = vunpack.c.l.s4 1983009808
        %v656 = vunpack.c.0.s8 %v655
        %v657 = vperm.slane %v651, %v656
        %v659 = vunpack.c.l.s4 1983009808
        %v660 = vunpack.c.0.s8 %v659
        %v661 = vperm.slane %v653, %v660
        %v662 = vrot.slane %v657, 4
        %v663 = vsel %vm394, %v662, %v645
        %v664 = vrot.slane %v645, 4
        %v665 = vsel %vm394, %v657, %v664
        %v667 = vunpack.c.l.s4 1934713408
        %v668 = vunpack.c.0.s8 %v667
        %v669 = vperm.slane %v663, %v668
        %v671 = vunpack.c.l.s4 1934713408
        %v672 = vunpack.c.0.s8 %v671
        %v673 = vperm.slane %v665, %v672
        %v674 = vrot.slane %v661, 4
        %v675 = vsel %vm394, %v674, %v649
        %v676 = vrot.slane %v649, 4
        %v677 = vsel %vm394, %v661, %v676
        %v679 = vunpack.c.l.s4 1934713408
        %v680 = vunpack.c.0.s8 %v679
        %v681 = vperm.slane %v675, %v680
        %v683 = vunpack.c.l.s4 1934713408
        %v684 = vunpack.c.0.s8 %v683
        %v685 = vperm.slane %v677, %v684
        %v686 = vrot.slane %v669, 4
        %v687 = vsel %vm394, 0.0, %v686
        %v688 = vrot.slane %v673, 4
        %v689 = vsel %vm394, 0.0, %v688
        %v690 = vrot.slane %v681, 4
        %v691 = vsel %vm394, 0.0, %v690
        %v692 = vrot.slane %v685, 4
        %v693 = vsel %vm394, 0.0, %v692
        %v694 = vsel %vm394, %v688, %v669
        %v696 = vunpack.c.l.s4 1983009808
        %v697 = vunpack.c.0.s8 %v696
        %v698 = vperm.slane %v694, %v697
        %v699 = vrot.slane %v689, 4
        %v700 = vsel %vm394, %v699, %v687
        %v702 = vunpack.c.l.s4 1983009808
        %v703 = vunpack.c.0.s8 %v702
        %v704 = vperm.slane %v700, %v703
        %v705 = vsel %vm394, %v692, %v681
        %v707 = vunpack.c.l.s4 1983009808
        %v708 = vunpack.c.0.s8 %v707
        %v709 = vperm.slane %v705, %v708
        %v710 = vrot.slane %v693, 4
        %v711 = vsel %vm394, %v710, %v691
        %v713 = vunpack.c.l.s4 1983009808
        %v714 = vunpack.c.0.s8 %v713
        %v715 = vperm.slane %v711, %v714
        %v716 = vrot.slane %v704, 4
        %v717 = vsel %vm394, %v716, %v698
        %v718 = vrot.slane %v698, 4
        %v719 = vsel %vm394, %v704, %v718
        %v721 = vunpack.c.l.s4 1934713408
        %v722 = vunpack.c.0.s8 %v721
        %v723 = vperm.slane %v717, %v722
        %v725 = vunpack.c.l.s4 1934713408
        %v726 = vunpack.c.0.s8 %v725
        %v727 = vperm.slane %v719, %v726
        %v728 = vrot.slane %v715, 4
        %v729 = vsel %vm394, %v728, %v709
        %v730 = vrot.slane %v709, 4
        %v731 = vsel %vm394, %v715, %v730
        %v733 = vunpack.c.l.s4 1934713408
        %v734 = vunpack.c.0.s8 %v733
        %v735 = vperm.slane %v729, %v734
        %v737 = vunpack.c.l.s4 1934713408
        %v738 = vunpack.c.0.s8 %v737
        %v739 = vperm.slane %v731, %v738
        %v740 = vrot.slane %v735, 4
        %v741 = vsel %vm394, %v740, %v723
        %v742 = vrot.slane %v723, 4
        %v743 = vsel %vm394, %v735, %v742
        %v744 = vrot.slane %v739, 4
        %v745 = vsel %vm394, %v744, %v727
        %v746 = vrot.slane %v727, 4
        %v747 = vsel %vm394, %v739, %v746
        %vm748 = vcmask 64512
        %v750 = vsel %vm748, %v497, 0
        %v753 = vsel %vm748, %v619, 0
        %755 = vmatpush.xpose.msra.mxu0 0.0
        %756 = vmatpush.xpose.msra.mxu0 0.0
        %757 = vmatpush.xpose.msra.mxu0 0.0
        %758 = vmatpush.xpose.msra.mxu0 0.0
        %759 = vmatpush.xpose.msra.mxu0 0.0
        %760 = vmatpush.xpose.msra.mxu0 0.0
        %761 = vmatpush.xpose.msra.mxu0 0.0
        %762 = vmatpush.xpose.msra.mxu0 0.0
        %763 = vmatpush.xpose.msra.mxu0 0.0
        %764 = vmatpush.xpose.msra.mxu0 0.0
        %765 = vmatpush.xpose.msra.mxu0 0.0
        %766 = vmatpush.xpose.msra.mxu0 0.0
        %767 = vmatpush.xpose.msra.mxu0 0.0
        %768 = vmatpush.xpose.msra.mxu0 0.0
        %769 = vmatpush.xpose.msra.mxu0 0.0
        %770 = vmatpush.xpose.msra.mxu0 %v753
        %771 = vmatmul.f32.gmra.mxu0 %v750
        %v772 = vpop.f32.mrf.mxu0
        %v773 = vadd.f32 0.0, %v772
        %774 = vdwg.mxu0
        %v776 = vsel %vm748, %v499, 0
        %v779 = vsel %vm748, %v621, 0
        %781 = vmatpush.xpose.msra.mxu0 0.0
        %782 = vmatpush.xpose.msra.mxu0 0.0
        %783 = vmatpush.xpose.msra.mxu0 0.0
        %784 = vmatpush.xpose.msra.mxu0 0.0
        %785 = vmatpush.xpose.msra.mxu0 0.0
        %786 = vmatpush.xpose.msra.mxu0 0.0
        %787 = vmatpush.xpose.msra.mxu0 0.0
        %788 = vmatpush.xpose.msra.mxu0 0.0
        %789 = vmatpush.xpose.msra.mxu0 0.0
        %790 = vmatpush.xpose.msra.mxu0 0.0
        %791 = vmatpush.xpose.msra.mxu0 0.0
        %792 = vmatpush.xpose.msra.mxu0 0.0
        %793 = vmatpush.xpose.msra.mxu0 0.0
        %794 = vmatpush.xpose.msra.mxu0 0.0
        %795 = vmatpush.xpose.msra.mxu0 0.0
        %796 = vmatpush.xpose.msra.mxu0 %v779
        %797 = vmatmul.f32.gmra.mxu0 %v776
        %v798 = vpop.f32.mrf.mxu0
        %v799 = vadd.f32 0.0, %v798
        %800 = vdwg.mxu0
        %v802 = vsel %vm748, %v501, 0
        %v805 = vsel %vm748, %v623, 0
        %807 = vmatpush.xpose.msra.mxu0 0.0
        %808 = vmatpush.xpose.msra.mxu0 0.0
        %809 = vmatpush.xpose.msra.mxu0 0.0
        %810 = vmatpush.xpose.msra.mxu0 0.0
        %811 = vmatpush.xpose.msra.mxu0 0.0
        %812 = vmatpush.xpose.msra.mxu0 0.0
        %813 = vmatpush.xpose.msra.mxu0 0.0
        %814 = vmatpush.xpose.msra.mxu0 0.0
        %815 = vmatpush.xpose.msra.mxu0 0.0
        %816 = vmatpush.xpose.msra.mxu0 0.0
        %817 = vmatpush.xpose.msra.mxu0 0.0
        %818 = vmatpush.xpose.msra.mxu0 0.0
        %819 = vmatpush.xpose.msra.mxu0 0.0
        %820 = vmatpush.xpose.msra.mxu0 0.0
        %821 = vmatpush.xpose.msra.mxu0 0.0
        %822 = vmatpush.xpose.msra.mxu0 %v805
        %823 = vmatmul.f32.gmra.mxu0 %v802
        %v824 = vpop.f32.mrf.mxu0
        %v825 = vadd.f32 0.0, %v824
        %826 = vdwg.mxu0
        %v828 = vsel %vm748, %v503, 0
        %v831 = vsel %vm748, %v625, 0
        %833 = vmatpush.xpose.msra.mxu0 0.0
        %834 = vmatpush.xpose.msra.mxu0 0.0
        %835 = vmatpush.xpose.msra.mxu0 0.0
        %836 = vmatpush.xpose.msra.mxu0 0.0
        %837 = vmatpush.xpose.msra.mxu0 0.0
        %838 = vmatpush.xpose.msra.mxu0 0.0
        %839 = vmatpush.xpose.msra.mxu0 0.0
        %840 = vmatpush.xpose.msra.mxu0 0.0
        %841 = vmatpush.xpose.msra.mxu0 0.0
        %842 = vmatpush.xpose.msra.mxu0 0.0
        %843 = vmatpush.xpose.msra.mxu0 0.0
        %844 = vmatpush.xpose.msra.mxu0 0.0
        %845 = vmatpush.xpose.msra.mxu0 0.0
        %846 = vmatpush.xpose.msra.mxu0 0.0
        %847 = vmatpush.xpose.msra.mxu0 0.0
        %848 = vmatpush.xpose.msra.mxu0 %v831
        %849 = vmatmul.f32.gmra.mxu0 %v828
        %v850 = vpop.f32.mrf.mxu0
        %v851 = vadd.f32 0.0, %v850
        %852 = vdwg.mxu0
        %v853 = vsel %vm748, %v773, -inf
        %854 = vmax.xlane.f32.xlu0 %v853
        %v855 = vpop.xlane.xlu0 %854
        %v856 = vsel %vm748, %v799, -inf
        %857 = vmax.xlane.f32.xlu0 %v856
        %v858 = vpop.xlane.xlu0 %857
        %v859 = vsel %vm748, %v825, -inf
        %860 = vmax.xlane.f32.xlu0 %v859
        %v861 = vpop.xlane.xlu0 %860
        %v862 = vsel %vm748, %v851, -inf
        %863 = vmax.xlane.f32.xlu0 %v862
        %v864 = vpop.xlane.xlu0 %863
        %v865 = vsub.f32 %v773, %v855
        %v866 = vsub.f32 %v799, %v858
        %v867 = vsub.f32 %v825, %v861
        %v868 = vsub.f32 %v851, %v864
        %v869 = vmul.f32 %v865, 1.442695
        %v870 = vpow.pop %v869
        %v871 = vmul.f32 %v866, 1.442695
        %v872 = vpow.pop %v871
        %v873 = vmul.f32 %v867, 1.442695
        %v874 = vpow.pop %v873
        %v875 = vmul.f32 %v868, 1.442695
        %v876 = vpow.pop %v875
        %v877 = vsel %vm748, %v870, 0.0
        %878 = vadd.xlane.f32.xlu0 %v877
        %v879 = vpop.xlane.xlu0 %878
        %v880 = vsel %vm748, %v872, 0.0
        %881 = vadd.xlane.f32.xlu0 %v880
        %v882 = vpop.xlane.xlu0 %881
        %v883 = vsel %vm748, %v874, 0.0
        %884 = vadd.xlane.f32.xlu0 %v883
        %v885 = vpop.xlane.xlu0 %884
        %v886 = vsel %vm748, %v876, 0.0
        %887 = vadd.xlane.f32.xlu0 %v886
        %v888 = vpop.xlane.xlu0 %887
        %v889 = vrcp.pop %v879
        %v890 = vmul.f32 %v879, %v889
        %v891 = vsub.f32 1.0, %v890
        %v892 = vmul.f32 %v889, %v891
        %v893 = vadd.f32 %v889, %v892
        %vm894 = vweird.f32 %v879
        %vm895 = vweird.f32 %v889
        %vm896 = vmor %vm894, %vm895
        %v897 = vsel %vm896, %v889, %v893
        %v898 = vand.u32 2147483647, %v879
        %vm899 = vcmp.eq.f32.partialorder %v898, 8.507059e+37
        %v900 = vand.u32 %v879, 2147483648
        %v901 = vor.u32 1.1754944e-38, %v900
        %v902 = vsel %vm899, %v901, %v897
        %v903 = vrcp.pop %v882
        %v904 = vmul.f32 %v882, %v903
        %v905 = vsub.f32 1.0, %v904
        %v906 = vmul.f32 %v903, %v905
        %v907 = vadd.f32 %v903, %v906
        %vm908 = vweird.f32 %v882
        %vm909 = vweird.f32 %v903
        %vm910 = vmor %vm908, %vm909
        %v911 = vsel %vm910, %v903, %v907
        %v912 = vand.u32 2147483647, %v882
        %vm913 = vcmp.eq.f32.partialorder %v912, 8.507059e+37
        %v914 = vand.u32 %v882, 2147483648
        %v915 = vor.u32 1.1754944e-38, %v914
        %v916 = vsel %vm913, %v915, %v911
        %v917 = vrcp.pop %v885
        %v918 = vmul.f32 %v885, %v917
        %v919 = vsub.f32 1.0, %v918
        %v920 = vmul.f32 %v917, %v919
        %v921 = vadd.f32 %v917, %v920
        %vm922 = vweird.f32 %v885
        %vm923 = vweird.f32 %v917
        %vm924 = vmor %vm922, %vm923
        %v925 = vsel %vm924, %v917, %v921
        %v926 = vand.u32 2147483647, %v885
        %vm927 = vcmp.eq.f32.partialorder %v926, 8.507059e+37
        %v928 = vand.u32 %v885, 2147483648
        %v929 = vor.u32 1.1754944e-38, %v928
        %v930 = vsel %vm927, %v929, %v925
        %v931 = vrcp.pop %v888
        %v932 = vmul.f32 %v888, %v931
        %v933 = vsub.f32 1.0, %v932
        %v934 = vmul.f32 %v931, %v933
        %v935 = vadd.f32 %v931, %v934
        %vm936 = vweird.f32 %v888
        %vm937 = vweird.f32 %v931
        %vm938 = vmor %vm936, %vm937
        %v939 = vsel %vm938, %v931, %v935
        %v940 = vand.u32 2147483647, %v888
        %vm941 = vcmp.eq.f32.partialorder %v940, 8.507059e+37
        %v942 = vand.u32 %v888, 2147483648
        %v943 = vor.u32 1.1754944e-38, %v942
        %v944 = vsel %vm941, %v943, %v939
        %v945 = vmul.f32 %v870, %v902
        %v946 = vmul.f32 %v872, %v916
        %v947 = vmul.f32 %v874, %v930
        %v948 = vmul.f32 %v876, %v944
        %v950 = vsel %vm748, %v945, 0
        %952 = vmatpush.msra.mxu0 0.0
        %953 = vmatpush.msra.mxu0 0.0
        %954 = vmatpush.msra.mxu0 0.0
        %955 = vmatpush.msra.mxu0 0.0
        %956 = vmatpush.msra.mxu0 0.0
        %957 = vmatpush.msra.mxu0 0.0
        %958 = vmatpush.msra.mxu0 0.0
        %959 = vmatpush.msra.mxu0 0.0
        %960 = vmatpush.msra.mxu0 0.0
        %961 = vmatpush.msra.mxu0 0.0
        %962 = vmatpush.msra.mxu0 0.0
        %963 = vmatpush.msra.mxu0 0.0
        %964 = vmatpush.msra.mxu0 0.0
        %965 = vmatpush.msra.mxu0 0.0
        %966 = vmatpush.msra.mxu0 0.0
        %967 = vmatpush.msra.mxu0 %v741
        %968 = vmatmul.f32.gmra.mxu0 %v950
        %v969 = vpop.f32.mrf.mxu0
        %v970 = vadd.f32 0.0, %v969
        %971 = vdwg.mxu0
        %v973 = vsel %vm748, %v946, 0
        %975 = vmatpush.msra.mxu0 0.0
        %976 = vmatpush.msra.mxu0 0.0
        %977 = vmatpush.msra.mxu0 0.0
        %978 = vmatpush.msra.mxu0 0.0
        %979 = vmatpush.msra.mxu0 0.0
        %980 = vmatpush.msra.mxu0 0.0
        %981 = vmatpush.msra.mxu0 0.0
        %982 = vmatpush.msra.mxu0 0.0
        %983 = vmatpush.msra.mxu0 0.0
        %984 = vmatpush.msra.mxu0 0.0
        %985 = vmatpush.msra.mxu0 0.0
        %986 = vmatpush.msra.mxu0 0.0
        %987 = vmatpush.msra.mxu0 0.0
        %988 = vmatpush.msra.mxu0 0.0
        %989 = vmatpush.msra.mxu0 0.0
        %990 = vmatpush.msra.mxu0 %v743
        %991 = vmatmul.f32.gmra.mxu0 %v973
        %v992 = vpop.f32.mrf.mxu0
        %v993 = vadd.f32 0.0, %v992
        %994 = vdwg.mxu0
        %v996 = vsel %vm748, %v947, 0
        %998 = vmatpush.msra.mxu0 0.0
        %999 = vmatpush.msra.mxu0 0.0
        %1000 = vmatpush.msra.mxu0 0.0
        %1001 = vmatpush.msra.mxu0 0.0
        %1002 = vmatpush.msra.mxu0 0.0
        %1003 = vmatpush.msra.mxu0 0.0
        %1004 = vmatpush.msra.mxu0 0.0
        %1005 = vmatpush.msra.mxu0 0.0
        %1006 = vmatpush.msra.mxu0 0.0
        %1007 = vmatpush.msra.mxu0 0.0
        %1008 = vmatpush.msra.mxu0 0.0
        %1009 = vmatpush.msra.mxu0 0.0
        %1010 = vmatpush.msra.mxu0 0.0
        %1011 = vmatpush.msra.mxu0 0.0
        %1012 = vmatpush.msra.mxu0 0.0
        %1013 = vmatpush.msra.mxu0 %v745
        %1014 = vmatmul.f32.gmra.mxu0 %v996
        %v1015 = vpop.f32.mrf.mxu0
        %v1016 = vadd.f32 0.0, %v1015
        %1017 = vdwg.mxu0
        %v1019 = vsel %vm748, %v948, 0
        %1021 = vmatpush.msra.mxu0 0.0
        %1022 = vmatpush.msra.mxu0 0.0
        %1023 = vmatpush.msra.mxu0 0.0
        %1024 = vmatpush.msra.mxu0 0.0
        %1025 = vmatpush.msra.mxu0 0.0
        %1026 = vmatpush.msra.mxu0 0.0
        %1027 = vmatpush.msra.mxu0 0.0
        %1028 = vmatpush.msra.mxu0 0.0
        %1029 = vmatpush.msra.mxu0 0.0
        %1030 = vmatpush.msra.mxu0 0.0
        %1031 = vmatpush.msra.mxu0 0.0
        %1032 = vmatpush.msra.mxu0 0.0
        %1033 = vmatpush.msra.mxu0 0.0
        %1034 = vmatpush.msra.mxu0 0.0
        %1035 = vmatpush.msra.mxu0 0.0
        %1036 = vmatpush.msra.mxu0 %v747
        %1037 = vmatmul.f32.gmra.mxu0 %v1019
        %v1038 = vpop.f32.mrf.mxu0
        %v1039 = vadd.f32 0.0, %v1038
        %1040 = vdwg.mxu0
        %v1041 = vrot.slane %v1016, 4
        %v1042 = vsel %vm394, %v1041, %v970
        %v1043 = vrot.slane %v970, 4
        %v1044 = vsel %vm394, %v1016, %v1043
        %v1046 = vunpack.c.l.s4 1983009808
        %v1047 = vunpack.c.0.s8 %v1046
        %v1048 = vperm.slane %v1042, %v1047
        %v1050 = vunpack.c.l.s4 1983009808
        %v1051 = vunpack.c.0.s8 %v1050
        %v1052 = vperm.slane %v1044, %v1051
        %v1053 = vrot.slane %v1039, 4
        %v1054 = vsel %vm394, %v1053, %v993
        %v1055 = vrot.slane %v993, 4
        %v1056 = vsel %vm394, %v1039, %v1055
        %v1058 = vunpack.c.l.s4 1983009808
        %v1059 = vunpack.c.0.s8 %v1058
        %v1060 = vperm.slane %v1054, %v1059
        %v1062 = vunpack.c.l.s4 1983009808
        %v1063 = vunpack.c.0.s8 %v1062
        %v1064 = vperm.slane %v1056, %v1063
        %v1065 = vrot.slane %v1060, 4
        %v1066 = vsel %vm394, %v1065, %v1048
        %v1067 = vrot.slane %v1048, 4
        %v1068 = vsel %vm394, %v1060, %v1067
        %v1070 = vunpack.c.l.s4 1934713408
        %v1071 = vunpack.c.0.s8 %v1070
        %v1072 = vperm.slane %v1066, %v1071
        %v1074 = vunpack.c.l.s4 1934713408
        %v1075 = vunpack.c.0.s8 %v1074
        %v1076 = vperm.slane %v1068, %v1075
        %v1077 = vrot.slane %v1064, 4
        %v1078 = vsel %vm394, %v1077, %v1052
        %v1079 = vrot.slane %v1052, 4
        %v1080 = vsel %vm394, %v1064, %v1079
        %v1082 = vunpack.c.l.s4 1934713408
        %v1083 = vunpack.c.0.s8 %v1082
        %v1084 = vperm.slane %v1078, %v1083
        %v1086 = vunpack.c.l.s4 1934713408
        %v1087 = vunpack.c.0.s8 %v1086
        %v1088 = vperm.slane %v1080, %v1087
        %v1089 = vrot.slane %v1072, 4
        %v1090 = vsel %vm394, 0.0, %v1089
        %v1091 = vrot.slane %v1076, 4
        %v1092 = vsel %vm394, 0.0, %v1091
        %v1093 = vrot.slane %v1084, 4
        %v1094 = vsel %vm394, 0.0, %v1093
        %v1095 = vrot.slane %v1088, 4
        %v1096 = vsel %vm394, 0.0, %v1095
        %v1097 = vsel %vm394, %v1091, %v1072
        %v1099 = vunpack.c.l.s4 1983009808
        %v1100 = vunpack.c.0.s8 %v1099
        %v1101 = vperm.slane %v1097, %v1100
        %v1102 = vrot.slane %v1092, 4
        %v1103 = vsel %vm394, %v1102, %v1090
        %v1105 = vunpack.c.l.s4 1983009808
        %v1106 = vunpack.c.0.s8 %v1105
        %v1107 = vperm.slane %v1103, %v1106
        %v1108 = vsel %vm394, %v1095, %v1084
        %v1110 = vunpack.c.l.s4 1983009808
        %v1111 = vunpack.c.0.s8 %v1110
        %v1112 = vperm.slane %v1108, %v1111
        %v1113 = vrot.slane %v1096, 4
        %v1114 = vsel %vm394, %v1113, %v1094
        %v1116 = vunpack.c.l.s4 1983009808
        %v1117 = vunpack.c.0.s8 %v1116
        %v1118 = vperm.slane %v1114, %v1117
        %v1119 = vrot.slane %v1107, 4
        %v1120 = vsel %vm394, %v1119, %v1101
        %v1121 = vrot.slane %v1101, 4
        %v1122 = vsel %vm394, %v1107, %v1121
        %v1124 = vunpack.c.l.s4 1934713408
        %v1125 = vunpack.c.0.s8 %v1124
        %v1126 = vperm.slane %v1120, %v1125
        %v1128 = vunpack.c.l.s4 1934713408
        %v1129 = vunpack.c.0.s8 %v1128
        %v1130 = vperm.slane %v1122, %v1129
        %v1131 = vrot.slane %v1118, 4
        %v1132 = vsel %vm394, %v1131, %v1112
        %v1133 = vrot.slane %v1112, 4
        %v1134 = vsel %vm394, %v1118, %v1133
        %v1136 = vunpack.c.l.s4 1934713408
        %v1137 = vunpack.c.0.s8 %v1136
        %v1138 = vperm.slane %v1132, %v1137
        %v1140 = vunpack.c.l.s4 1934713408
        %v1141 = vunpack.c.0.s8 %v1140
        %v1142 = vperm.slane %v1134, %v1141
        %v1143 = vrot.slane %v1138, 4
        %v1144 = vsel %vm394, %v1143, %v1126
        %v1145 = vrot.slane %v1126, 4
        %v1146 = vsel %vm394, %v1138, %v1145
        %v1147 = vrot.slane %v1142, 4
        %v1148 = vsel %vm394, %v1147, %v1130
        %v1149 = vrot.slane %v1130, 4
        %v1150 = vsel %vm394, %v1142, %v1149
        %1152 = vrot.lane.b32.xlu0 %v1146, 8
        %v1153 = vpop.permute.xlu0 %1152
        %1156 = vrot.lane.b32.xlu0 %v1148, 16
        %v1157 = vpop.permute.xlu0 %1156
        %1160 = vrot.lane.b32.xlu0 %v1150, 24
        %v1161 = vpop.permute.xlu0 %1160
        %v1163 = vsel %vm748, %v1144, %v1153
        %vm1164 = vcmask 130048
        %v1165 = vsel %vm1164, %v1163, %v1157
        %vm1166 = vcmask 195584
        %v1167 = vsel %vm1166, %v1165, %v1161
        %v1168 = vld [vmem:[%s3] sm:$0xff]
        %v1169 = vld [vmem:[%s3 + $0x8] sm:$0xff]
        %v1170 = vld [vmem:[%s3 + $0x10] sm:$0xff]
        %v1171 = vld [vmem:[%s3 + $0x18] sm:$0xff]
        %v1172 = vld [vmem:[%s4] sm:$0x1]
        %v1174 = vperm.slane %v1172, 0
        %v1177 = vsel %vm359, %v1167, 0
        %1179 = vmatpush.msra.mxu0 0.0
        %1180 = vmatpush.msra.mxu0 0.0
        %1181 = vmatpush.msra.mxu0 0.0
        %1182 = vmatpush.msra.mxu0 0.0
        %1183 = vmatpush.msra.mxu0 0.0
        %1184 = vmatpush.msra.mxu0 0.0
        %1185 = vmatpush.msra.mxu0 0.0
        %1186 = vmatpush.msra.mxu0 0.0
        %1187 = vmatpush.msra.mxu0 0.0
        %1188 = vmatpush.msra.mxu0 0.0
        %1189 = vmatpush.msra.mxu0 0.0
        %1190 = vmatpush.msra.mxu0 0.0
        %1191 = vmatpush.msra.mxu0 %v1171
        %1192 = vmatpush.msra.mxu0 %v1170
        %1193 = vmatpush.msra.mxu0 %v1169
        %1194 = vmatpush.msra.mxu0 %v1168
        %1195 = vmatmul.f32.gmra.mxu0 %v1177
        %v1196 = vpop.f32.mrf.mxu0
        %v1197 = vadd.f32 %v1174, %v1196
        %1198 = vdwg.mxu0
        %v1199 = vadd.f32 %v350, %v1197
        %v1200 = vld [vmem:[%s5] sm:$0xff]
        %v1201 = vld [vmem:[%s5 + $0x8] sm:$0xff]
        %v1202 = vld [vmem:[%s5 + $0x10] sm:$0xff]
        %v1203 = vld [vmem:[%s5 + $0x18] sm:$0xff]
        %v1204 = vld [vmem:[%s6] sm:$0x1]
        %v1206 = vperm.slane %v1204, 0
        %v1209 = vsel %vm359, %v1199, 0
        %1211 = vmatpush.msra.mxu0 0.0
        %1212 = vmatpush.msra.mxu0 0.0
        %1213 = vmatpush.msra.mxu0 0.0
        %1214 = vmatpush.msra.mxu0 0.0
        %1215 = vmatpush.msra.mxu0 0.0
        %1216 = vmatpush.msra.mxu0 0.0
        %1217 = vmatpush.msra.mxu0 0.0
        %1218 = vmatpush.msra.mxu0 0.0
        %1219 = vmatpush.msra.mxu0 0.0
        %1220 = vmatpush.msra.mxu0 0.0
        %1221 = vmatpush.msra.mxu0 0.0
        %1222 = vmatpush.msra.mxu0 0.0
        %1223 = vmatpush.msra.mxu0 %v1203
        %1224 = vmatpush.msra.mxu0 %v1202
        %1225 = vmatpush.msra.mxu0 %v1201
        %1226 = vmatpush.msra.mxu0 %v1200
        %1227 = vmatmul.f32.gmra.mxu0 %v1209
        %v1228 = vpop.f32.mrf.mxu0
        %v1229 = vadd.f32 %v1206, %v1228
        %1230 = vdwg.mxu0
        %v1231 = vmax.f32 %v1229, 0.0
        %v1232 = vld [vmem:[%s7] sm:$0xff]
        %v1233 = vld [vmem:[%s7 + $0x8] sm:$0xff]
        %v1234 = vld [vmem:[%s7 + $0x10] sm:$0xff]
        %v1235 = vld [vmem:[%s7 + $0x18] sm:$0xff]
        %v1236 = vld [vmem:[%s7 + $0x20] sm:$0xff]
        %v1237 = vld [vmem:[%s7 + $0x28] sm:$0xff]
        %v1238 = vld [vmem:[%s7 + $0x30] sm:$0xff]
        %v1239 = vld [vmem:[%s7 + $0x38] sm:$0xff]
        %v1240 = vld [vmem:[%s8] sm:$0x1]
        %v1242 = vperm.slane %v1240, 0
        %vm1244 = vcmask 523264
        %v1246 = vsel %vm1244, %v1231, 0
        %1248 = vmatpush.msra.mxu0 0.0
        %1249 = vmatpush.msra.mxu0 0.0
        %1250 = vmatpush.msra.mxu0 0.0
        %1251 = vmatpush.msra.mxu0 0.0
        %1252 = vmatpush.msra.mxu0 0.0
        %1253 = vmatpush.msra.mxu0 0.0
        %1254 = vmatpush.msra.mxu0 0.0
        %1255 = vmatpush.msra.mxu0 0.0
        %1256 = vmatpush.msra.mxu0 %v1239
        %1257 = vmatpush.msra.mxu0 %v1238
        %1258 = vmatpush.msra.mxu0 %v1237
        %1259 = vmatpush.msra.mxu0 %v1236
        %1260 = vmatpush.msra.mxu0 %v1235
        %1261 = vmatpush.msra.mxu0 %v1234
        %1262 = vmatpush.msra.mxu0 %v1233
        %1263 = vmatpush.msra.mxu0 %v1232
        %1264 = vmatmul.f32.gmra.mxu0 %v1246
        %v1265 = vpop.f32.mrf.mxu0
        %v1266 = vadd.f32 %v1242, %v1265
        %1267 = vdwg.mxu0
        %v1268 = vadd.f32 %v1199, %v1266
        %1269 = vst.msk [vmem:[%s349] sm:$0xff] %vm359, %v1268
        %s1270 = sand.u32 %s228, 1
        %s1271 = scalar_lea.sflag [#allocation4], %s1270
        %s1272 = sand.u32 %s228, 1
        %s1273 = smul.addr %s1272, 8
        %s1274 = scalar_lea.vmem [#allocation5], %s1273
        // Predicated region
        $region61: #{tpu_custom_call.1} parent=55 // pred_check
          %p1275 = pneg %p238
        $region62: #{tpu_custom_call.1} parent=55 // pred_check_branch
          %1277 = sbr.rel (%p1275) target = $region64
        $region63: #{tpu_custom_call.1} parent=55 // pred_region
          %1279 = vsyncadd %s1271, 0
          %s1280 = smul.addr %s26, 8
          %s1281 = scalar_lea.hbm %s9, %s1280
          %s1283 = sshll.u32 %s1274, 4
          %s1284 = int_to_ptr.vmem [resolvable:$true] %s1283
          %s1285 = sshll.u32 %s1281, 4
          %s1286 = int_to_ptr.hbm [resolvable:$true] %s1285
          %1288 = dma.vmem_to_hbm [thread:$0]  %s1284, 128, %s1286, %s1271
        $region64: #{tpu_custom_call.1} parent=55 // pred_fallthru
          _
      $region56: #{tpu_custom_call.1} parent=5 // pred_fallthru
        _
      %p1289 = scmp.le.s32.totalorder 2, %s21
      // Predicated region
      $region65: #{tpu_custom_call.1} parent=5 // pred_check
        %p1290 = pneg %p1289
      $region66: #{tpu_custom_call.1} parent=5 // pred_check_branch
        %1292 = sbr.rel (%p1290) target = $region68
      $region67: #{tpu_custom_call.1} parent=5 // pred_region
        %s1293 = ssub.s32 %s21, 2
        // Predicated region
        $region69: #{tpu_custom_call.1} parent=67 // pred_check
          %p1294 = pneg %p244
        $region70: #{tpu_custom_call.1} parent=67 // pred_check_branch
          %1296 = sbr.rel (%p1294) target = $region72
        $region71: #{tpu_custom_call.1} parent=67 // pred_region
          %s1297 = sand.u32 %s229, 1
          %s1298 = scalar_lea.sflag [#allocation4], %s1297
          %s1299 = sand.u32 %s229, 1
          %s1300 = smul.addr %s1299, 8
          %s1301 = scalar_lea.vmem [#allocation5], %s1300
          %1303 = dma.done %s1298, 128
        $region72: #{tpu_custom_call.1} parent=67 // pred_fallthru
          _
      $region68: #{tpu_custom_call.1} parent=5 // pred_fallthru
        _
    $region6: #{tpu_custom_call.1} parent=1 // loop_footer
      %s25 = sadd.s32 1, %s21
    $region7: #{tpu_custom_call.1} parent=1 // loop_footer_branch
      %20 = sbr.rel target = $region3
    $region8: #{tpu_custom_call.1} parent=1 // loop_exit
      _
    %1304 = vsyncpa [#allocation3], 1
    %s1305 = scalar_lea.sflag [#allocation3], 1
    %1306 = vsyncpa %s1305, 1
    %1307 = vsyncpa [#allocation4], 1
    %s1308 = scalar_lea.sflag [#allocation4], 1
    %1309 = vsyncpa %s1308, 1

</llo_original>
